<compile_context>
chip_gen: v6e
topology: v6e:2x2x1
jax: 0.10.0
libtpu: 0.0.40
codegen_flags: <defaults>
</compile_context>

<pallas_src>
import jax
import jax.numpy as jnp
import numpy as np
from jax import lax
from jax.experimental import pallas as pl
from jax.experimental.pallas import tpu as pltpu

# ---- hyper-params consistent with HREncoder.__init__ (small synthetic sizes) ----
WORD_EMBED = 24
SUM_DEPTH = 8
EMBED = WORD_EMBED + SUM_DEPTH          # LSTM input_size = 32
RNN_SIZE = 16                           # encoder_rnn_size
NUM_LAYERS = 2                          # encoder_num_layers
ND = NUM_LAYERS * 2                     # (layer, direction) pairs
LAYER_DIM = NUM_LAYERS * 2 * RNN_SIZE   # 64
ZDIM = 2 * LAYER_DIM                    # 128 = ziphidden width = linear in/out dim

BATCH = 2
SEQ = 8
H = RNN_SIZE
H2 = 2 * H                              # 32 = per-layer bidirectional state width

IN_DIMS = tuple(EMBED if l == 0 else 2 * RNN_SIZE for l in range(NUM_LAYERS))
IN_MAX = max(IN_DIMS)                   # 32 (both layers here)


# --------------------------------------------------------------------------------------
# Kernel: single invocation, time loop unrolled inside.
# --------------------------------------------------------------------------------------
def hr_encoder_kernel(x_ref, w_ref, b_ref, wmu_ref, bmu_ref, o_ref):
    S = x_ref.shape[0]
    Bp = x_ref.shape[1]

    def lstm_layer(l, layer_in, h_prev, c_prev):
        in_dim = IN_DIMS[l]
        if in_dim < IN_MAX:  # static config; dead code here (all in_dims == IN_MAX)
            layer_in = jnp.concatenate(
                [layer_in, jnp.zeros((Bp, IN_MAX - in_dim), jnp.float32)], axis=1)
        # lhs = [layer_in | h_fwd | h_bwd]  -> one lane-dense [Bp, 8H] gate matmul
        lhs = jnp.concatenate([layer_in, h_prev], axis=1)          # [Bp, IN_MAX + 2H]
        gates = (jnp.dot(lhs, w_ref[l], preferred_element_type=jnp.float32)
                 + b_ref[l])                                        # [Bp, 128]
        # packed gate-column layout: [i_f i_b | f_f f_b | g_f g_b | o_f o_b]
        i_g = jax.nn.sigmoid(gates[:, 0 * H2:1 * H2])
        f_g = jax.nn.sigmoid(gates[:, 1 * H2:2 * H2])
        g_g = jnp.tanh(gates[:, 2 * H2:3 * H2])
        o_g = jax.nn.sigmoid(gates[:, 3 * H2:4 * H2])
        c_new = f_g * c_prev + i_g * g_g                            # [Bp, 2H] = [fwd|bwd]
        h_new = o_g * jnp.tanh(c_new)                               # [Bp, 2H] = [fwd|bwd]
        return h_new, c_new

    def step(t, carry):
        hs, cs = carry
        layer_in = x_ref[t]                                         # [Bp, EMBED]
        new_h, new_c = [], []
        for l in range(NUM_LAYERS):
            h_n, c_n = lstm_layer(l, layer_in, hs[l], cs[l])
            new_h.append(h_n)
            new_c.append(c_n)
            layer_in = h_n                  # [h_fwd|h_bwd] is already next layer's input
        return (tuple(new_h), tuple(new_c))

    zeros = jnp.zeros((Bp, H2), jnp.float32)   # hx = None in the PyTorch code
    init = (tuple(zeros for _ in range(NUM_LAYERS)),
            tuple(zeros for _ in range(NUM_LAYERS)))
    # "for i in range(seq_len - 1)" — fully unrolled for LLO scheduler visibility.
    hs, cs = lax.fori_loop(0, S - 1, step, init, unroll=True)

    # ziphidden + linear_mu, ONCE after the loop. z layout is [h0 | c0 | h1 | c1]
    # (directions adjacent inside each block); wmu's rows were permuted in the wrapper
    # so this matches torch's cat/transpose/view ordering exactly.
    z_parts = []
    for l in range(NUM_LAYERS):
        z_parts.append(hs[l])
        z_parts.append(cs[l])
    z = jnp.concatenate(z_parts, axis=1)                            # [Bp, ZDIM]
    o_ref[...] = (jnp.dot(z, wmu_ref[...], preferred_element_type=jnp.float32)
                  + bmu_ref[...])


# --------------------------------------------------------------------------------------
# Parameters (PyTorch nn.LSTM / nn.Linear layout) + wrapper-side packing.
# --------------------------------------------------------------------------------------
def init_params(key):
    """Deterministic synthetic parameters (shapes follow nn.LSTM / nn.Linear).
    The single bias per cell corresponds to (b_ih + b_hh) folded together."""
    keys = jax.random.split(key, 3 * ND + 2)
    wih, whh, bias = [], [], []
    k = 0
    for l in range(NUM_LAYERS):
        in_dim = IN_DIMS[l]
        for d in range(2):
            wih.append(jax.random.uniform(keys[k], (in_dim, 4 * H), jnp.float32, -0.25, 0.25)); k += 1
            whh.append(jax.random.uniform(keys[k], (H, 4 * H), jnp.float32, -0.25, 0.25)); k += 1
            bias.append(jax.random.uniform(keys[k], (1, 4 * H), jnp.float32, -0.25, 0.25)); k += 1
    wmu = jax.random.uniform(keys[k], (ZDIM, ZDIM), jnp.float32, -0.1, 0.1); k += 1
    bmu = jax.random.uniform(keys[k], (1, ZDIM), jnp.float32, -0.1, 0.1)
    return wih, whh, bias, wmu, bmu


def pack_params(params):
    """Pack per-(layer,dir) LSTM weights into one lane-dense matmul per layer and
    row-permute wmu so the kernel needs no lane shuffles. Host-side numpy, done once."""
    wih, whh, bias, wmu, bmu = params
    W_all = np.zeros((NUM_LAYERS, IN_MAX + H2, 8 * H), np.float32)
    b_all = np.zeros((NUM_LAYERS, 1, 8 * H), np.float32)
    for l in range(NUM_LAYERS):
        in_dim = IN_DIMS[l]
        for d in range(2):
            idx = l * 2 + d
            wih_ld = np.asarray(wih[idx])          # [in_dim, 4H], gate order [i,f,g,o]
            whh_ld = np.asarray(whh[idx])          # [H, 4H]
            b_ld = np.asarray(bias[idx])           # [1, 4H]
            for g in range(4):
                src = slice(g * H, (g + 1) * H)
                dst = slice((2 * g + d) * H, (2 * g + d + 1) * H)
                W_all[l, 0:in_dim, dst] = wih_ld[:, src]
                W_all[l, IN_MAX + d * H:IN_MAX + (d + 1) * H, dst] = whh_ld[:, src]
                b_all[l, 0, dst] = b_ld[0, src]
    # kernel z layout per layer-block: [h_f | h_b | c_f | c_b]; torch ziphidden layout
    # per (layer,dir) pair: [h | c].  Permute wmu rows so z_kernel @ wmu_p == z_torch @ wmu.
    perm = []
    for l in range(NUM_LAYERS):
        for hc in range(2):            # 0 -> hidden block, 1 -> cell block
            for d in range(2):
                torch_block = (l * 2 + d) * 2 + hc
                perm.extend(range(torch_block * H, (torch_block + 1) * H))
    wmu_p = np.asarray(wmu)[np.asarray(perm), :]
    return (jnp.asarray(W_all), jnp.asarray(b_all),
            jnp.asarray(wmu_p), jnp.asarray(bmu))


def hr_encoder_forward(x, packed):
    W_all, b_all, wmu_p, bmu = packed
    B, S, E = x.shape
    x_sbe = x.reshape(S, B, E)   # mirrors torch's .view(seq_len, batch_size, embed_size)
    Bp = max(8, B)               # pad batch to the f32 sublane minimum
    if Bp > B:
        x_sbe = jnp.concatenate(
            [x_sbe, jnp.zeros((S, Bp - B, E), x_sbe.dtype)], axis=1)

    out = pl.pallas_call(
        hr_encoder_kernel,
        out_shape=jax.ShapeDtypeStruct((Bp, ZDIM), jnp.float32),
        grid_spec=pltpu.PrefetchScalarGridSpec(
            num_scalar_prefetch=0,
            grid=(1,),                                     # single invocation
            in_specs=[
                pl.BlockSpec((S, Bp, E), lambda i: (0, 0, 0)),
                pl.BlockSpec(W_all.shape, lambda i: (0, 0, 0)),
                pl.BlockSpec(b_all.shape, lambda i: (0, 0, 0)),
                pl.BlockSpec(wmu_p.shape, lambda i: (0, 0)),
                pl.BlockSpec(bmu.shape, lambda i: (0, 0)),
            ],
            out_specs=pl.BlockSpec((Bp, ZDIM), lambda i: (0, 0)),
        ),
        compiler_params=pltpu.CompilerParams(
            dimension_semantics=("arbitrary",)),
    )(x_sbe, W_all, b_all, wmu_p, bmu)
    return out[:B]


# --------------------------------------------------------------------------------------
# Pure-JAX reference (eval-mode HREncoder.forward) using the *unpacked* torch-layout
# params, to validate both the kernel and the packing math.
# --------------------------------------------------------------------------------------
def hr_encoder_ref(x, params):
    wih, whh, bias, wmu, bmu = params
    B, S, E = x.shape
    x_sbe = x.reshape(S, B, E)
    h_list = [jnp.zeros((B, H), jnp.float32) for _ in range(ND)]
    c_list = [jnp.zeros((B, H), jnp.float32) for _ in range(ND)]
    mu = None
    for t in range(S - 1):
        layer_in = x_sbe[t]
        for l in range(NUM_LAYERS):
            outs = []
            for d in range(2):
                idx = l * 2 + d
                gates = layer_in @ wih[idx] + h_list[idx] @ whh[idx] + bias[idx]
                i_g = jax.nn.sigmoid(gates[:, :H])
                f_g = jax.nn.sigmoid(gates[:, H:2 * H])
                g_g = jnp.tanh(gates[:, 2 * H:3 * H])
                o_g = jax.nn.sigmoid(gates[:, 3 * H:])
                c_n = f_g * c_list[idx] + i_g * g_g
                h_n = o_g * jnp.tanh(c_n)
                h_list[idx] = h_n
                c_list[idx] = c_n
                outs.append(h_n)
            layer_in = jnp.concatenate(outs, axis=1)
        z = jnp.concatenate(
            [jnp.concatenate([h_list[i], c_list[i]], axis=1) for i in range(ND)], axis=1)
        mu = z @ wmu + bmu
    return mu


if __name__ == "__main__":
    key = jax.random.PRNGKey(0)
    kx, kp = jax.random.split(key)
    x = jax.random.normal(kx, (BATCH, SEQ, EMBED), dtype=jnp.float32)
    params = init_params(kp)
    packed = pack_params(params)

    out = jax.block_until_ready(hr_encoder_forward(x, packed))
    assert out.shape == (BATCH, ZDIM), out.shape

    ref = jax.block_until_ready(hr_encoder_ref(x, params))
    np.testing.assert_allclose(np.asarray(out), np.asarray(ref), rtol=2e-3, atol=2e-3)

    print("KERNEL_OK")
</pallas_src>

<mosaic_0001>
module attributes {stable_mosaic.version = 11 : i64} {
  func.func @hr_encoder_kernel(%arg0: i32, %arg1: memref<8x8x32xf32, #tpu.memory_space<vmem>>, %arg2: memref<2x64x128xf32, #tpu.memory_space<vmem>>, %arg3: memref<2x1x128xf32, #tpu.memory_space<vmem>>, %arg4: memref<128x128xf32, #tpu.memory_space<vmem>>, %arg5: memref<1x128xf32, #tpu.memory_space<vmem>>, %arg6: memref<8x128xf32, #tpu.memory_space<vmem>>) attributes {dimension_semantics = [#tpu.dimension_semantics<arbitrary>], iteration_bounds = array<i64: 1>, scalar_prefetch = 0 : i64, scratch_operands = 0 : i64, tpu.core_type = #tpu.core_type<tc>, window_params = [{pipeline_mode = #tpu.pipeline_mode<synchronous>, transform_indices = @transform_0, window_bounds = array<i64: 8, 8, 32>}, {pipeline_mode = #tpu.pipeline_mode<synchronous>, transform_indices = @transform_1, window_bounds = array<i64: 2, 64, 128>}, {pipeline_mode = #tpu.pipeline_mode<synchronous>, transform_indices = @transform_2, window_bounds = array<i64: 2, 1, 128>}, {pipeline_mode = #tpu.pipeline_mode<synchronous>, transform_indices = @transform_3, window_bounds = array<i64: 128, 128>}, {pipeline_mode = #tpu.pipeline_mode<synchronous>, transform_indices = @transform_4, window_bounds = array<i64: 1, 128>}, {pipeline_mode = #tpu.pipeline_mode<synchronous>, transform_indices = @transform_5, window_bounds = array<i64: 8, 128>}]} {
    %cst = arith.constant 0.000000e+00 : f32
    %0 = vector.broadcast %cst : f32 to vector<8x32xf32>
    %c0_i32 = arith.constant 0 : i32
    %1 = arith.index_cast %c0_i32 : i32 to index
    %c0 = arith.constant 0 : index
    %c0_0 = arith.constant 0 : index
    %2 = vector.load %arg1[%1, %c0, %c0_0] : memref<8x8x32xf32, #tpu.memory_space<vmem>>, vector<1x8x32xf32>
    %3 = vector.shape_cast %2 : vector<1x8x32xf32> to vector<8x32xf32>
    %4 = tpu.concatenate %3, %0 in 1 : vector<8x32xf32>, vector<8x32xf32> -> vector<8x64xf32>
    %c0_1 = arith.constant 0 : index
    %c0_2 = arith.constant 0 : index
    %c0_3 = arith.constant 0 : index
    %5 = vector.load %arg2[%c0_1, %c0_2, %c0_3] : memref<2x64x128xf32, #tpu.memory_space<vmem>>, vector<1x64x128xf32>
    %6 = vector.shape_cast %5 : vector<1x64x128xf32> to vector<64x128xf32>
    %cst_4 = arith.constant dense<0.000000e+00> : vector<8x128xf32>
    %7 = tpu.matmul %4, %6, %cst_4 {dimension_numbers = #tpu.dot_dimension_numbers<[1], [0], [0], [1], [0, 0, 1, 1], [], []>} : vector<8x64xf32>, vector<64x128xf32>, vector<8x128xf32> -> vector<8x128xf32>
    %c0_5 = arith.constant 0 : index
    %c0_6 = arith.constant 0 : index
    %c0_7 = arith.constant 0 : index
    %8 = vector.load %arg3[%c0_5, %c0_6, %c0_7] : memref<2x1x128xf32, #tpu.memory_space<vmem>>, vector<1x1x128xf32>
    %9 = vector.shape_cast %8 : vector<1x1x128xf32> to vector<1x128xf32>
    %10 = vector.broadcast %9 : vector<1x128xf32> to vector<8x128xf32>
    %11 = arith.addf %7, %10 : vector<8x128xf32>
    %12 = vector.extract_strided_slice %11 {offsets = [0, 0], sizes = [8, 32], strides = [1, 1]} : vector<8x128xf32> to vector<8x32xf32>
    %13 = arith.negf %12 : vector<8x32xf32>
    %14 = math.exp %13 : vector<8x32xf32>
    %cst_8 = arith.constant 1.000000e+00 : f32
    %15 = vector.broadcast %cst_8 : f32 to vector<8x32xf32>
    %16 = arith.addf %15, %14 : vector<8x32xf32>
    %17 = arith.divf %15, %16 : vector<8x32xf32>
    %18 = vector.extract_strided_slice %11 {offsets = [0, 32], sizes = [8, 32], strides = [1, 1]} : vector<8x128xf32> to vector<8x32xf32>
    %19 = arith.negf %18 : vector<8x32xf32>
    %20 = math.exp %19 : vector<8x32xf32>
    %cst_9 = arith.constant 1.000000e+00 : f32
    %21 = vector.broadcast %cst_9 : f32 to vector<8x32xf32>
    %22 = arith.addf %21, %20 : vector<8x32xf32>
    %23 = arith.divf %21, %22 : vector<8x32xf32>
    %24 = vector.extract_strided_slice %11 {offsets = [0, 64], sizes = [8, 32], strides = [1, 1]} : vector<8x128xf32> to vector<8x32xf32>
    %25 = math.tanh %24 : vector<8x32xf32>
    %26 = vector.extract_strided_slice %11 {offsets = [0, 96], sizes = [8, 32], strides = [1, 1]} : vector<8x128xf32> to vector<8x32xf32>
    %27 = arith.negf %26 : vector<8x32xf32>
    %28 = math.exp %27 : vector<8x32xf32>
    %cst_10 = arith.constant 1.000000e+00 : f32
    %29 = vector.broadcast %cst_10 : f32 to vector<8x32xf32>
    %30 = arith.addf %29, %28 : vector<8x32xf32>
    %31 = arith.divf %29, %30 : vector<8x32xf32>
    %32 = arith.mulf %23, %0 : vector<8x32xf32>
    %33 = arith.mulf %17, %25 : vector<8x32xf32>
    %34 = arith.addf %32, %33 : vector<8x32xf32>
    %35 = math.tanh %34 : vector<8x32xf32>
    %36 = arith.mulf %31, %35 : vector<8x32xf32>
    %37 = tpu.concatenate %36, %0 in 1 : vector<8x32xf32>, vector<8x32xf32> -> vector<8x64xf32>
    %c1 = arith.constant 1 : index
    %c0_11 = arith.constant 0 : index
    %c0_12 = arith.constant 0 : index
    %38 = vector.load %arg2[%c1, %c0_11, %c0_12] : memref<2x64x128xf32, #tpu.memory_space<vmem>>, vector<1x64x128xf32>
    %39 = vector.shape_cast %38 : vector<1x64x128xf32> to vector<64x128xf32>
    %cst_13 = arith.constant dense<0.000000e+00> : vector<8x128xf32>
    %40 = tpu.matmul %37, %39, %cst_13 {dimension_numbers = #tpu.dot_dimension_numbers<[1], [0], [0], [1], [0, 0, 1, 1], [], []>} : vector<8x64xf32>, vector<64x128xf32>, vector<8x128xf32> -> vector<8x128xf32>
    %c1_14 = arith.constant 1 : index
    %c0_15 = arith.constant 0 : index
    %c0_16 = arith.constant 0 : index
    %41 = vector.load %arg3[%c1_14, %c0_15, %c0_16] : memref<2x1x128xf32, #tpu.memory_space<vmem>>, vector<1x1x128xf32>
    %42 = vector.shape_cast %41 : vector<1x1x128xf32> to vector<1x128xf32>
    %43 = vector.broadcast %42 : vector<1x128xf32> to vector<8x128xf32>
    %44 = arith.addf %40, %43 : vector<8x128xf32>
    %45 = vector.extract_strided_slice %44 {offsets = [0, 0], sizes = [8, 32], strides = [1, 1]} : vector<8x128xf32> to vector<8x32xf32>
    %46 = arith.negf %45 : vector<8x32xf32>
    %47 = math.exp %46 : vector<8x32xf32>
    %cst_17 = arith.constant 1.000000e+00 : f32
    %48 = vector.broadcast %cst_17 : f32 to vector<8x32xf32>
    %49 = arith.addf %48, %47 : vector<8x32xf32>
    %50 = arith.divf %48, %49 : vector<8x32xf32>
    %51 = vector.extract_strided_slice %44 {offsets = [0, 32], sizes = [8, 32], strides = [1, 1]} : vector<8x128xf32> to vector<8x32xf32>
    %52 = arith.negf %51 : vector<8x32xf32>
    %53 = math.exp %52 : vector<8x32xf32>
    %cst_18 = arith.constant 1.000000e+00 : f32
    %54 = vector.broadcast %cst_18 : f32 to vector<8x32xf32>
    %55 = arith.addf %54, %53 : vector<8x32xf32>
    %56 = arith.divf %54, %55 : vector<8x32xf32>
    %57 = vector.extract_strided_slice %44 {offsets = [0, 64], sizes = [8, 32], strides = [1, 1]} : vector<8x128xf32> to vector<8x32xf32>
    %58 = math.tanh %57 : vector<8x32xf32>
    %59 = vector.extract_strided_slice %44 {offsets = [0, 96], sizes = [8, 32], strides = [1, 1]} : vector<8x128xf32> to vector<8x32xf32>
    %60 = arith.negf %59 : vector<8x32xf32>
    %61 = math.exp %60 : vector<8x32xf32>
    %cst_19 = arith.constant 1.000000e+00 : f32
    %62 = vector.broadcast %cst_19 : f32 to vector<8x32xf32>
    %63 = arith.addf %62, %61 : vector<8x32xf32>
    %64 = arith.divf %62, %63 : vector<8x32xf32>
    %65 = arith.mulf %56, %0 : vector<8x32xf32>
    %66 = arith.mulf %50, %58 : vector<8x32xf32>
    %67 = arith.addf %65, %66 : vector<8x32xf32>
    %68 = math.tanh %67 : vector<8x32xf32>
    %69 = arith.mulf %64, %68 : vector<8x32xf32>
    %c1_i32 = arith.constant 1 : i32
    %70 = arith.index_cast %c1_i32 : i32 to index
    %c0_20 = arith.constant 0 : index
    %c0_21 = arith.constant 0 : index
    %71 = vector.load %arg1[%70, %c0_20, %c0_21] : memref<8x8x32xf32, #tpu.memory_space<vmem>>, vector<1x8x32xf32>
    %72 = vector.shape_cast %71 : vector<1x8x32xf32> to vector<8x32xf32>
    %73 = tpu.concatenate %72, %36 in 1 : vector<8x32xf32>, vector<8x32xf32> -> vector<8x64xf32>
    %c0_22 = arith.constant 0 : index
    %c0_23 = arith.constant 0 : index
    %c0_24 = arith.constant 0 : index
    %74 = vector.load %arg2[%c0_22, %c0_23, %c0_24] : memref<2x64x128xf32, #tpu.memory_space<vmem>>, vector<1x64x128xf32>
    %75 = vector.shape_cast %74 : vector<1x64x128xf32> to vector<64x128xf32>
    %cst_25 = arith.constant dense<0.000000e+00> : vector<8x128xf32>
    %76 = tpu.matmul %73, %75, %cst_25 {dimension_numbers = #tpu.dot_dimension_numbers<[1], [0], [0], [1], [0, 0, 1, 1], [], []>} : vector<8x64xf32>, vector<64x128xf32>, vector<8x128xf32> -> vector<8x128xf32>
    %c0_26 = arith.constant 0 : index
    %c0_27 = arith.constant 0 : index
    %c0_28 = arith.constant 0 : index
    %77 = vector.load %arg3[%c0_26, %c0_27, %c0_28] : memref<2x1x128xf32, #tpu.memory_space<vmem>>, vector<1x1x128xf32>
    %78 = vector.shape_cast %77 : vector<1x1x128xf32> to vector<1x128xf32>
    %79 = vector.broadcast %78 : vector<1x128xf32> to vector<8x128xf32>
    %80 = arith.addf %76, %79 : vector<8x128xf32>
    %81 = vector.extract_strided_slice %80 {offsets = [0, 0], sizes = [8, 32], strides = [1, 1]} : vector<8x128xf32> to vector<8x32xf32>
    %82 = arith.negf %81 : vector<8x32xf32>
    %83 = math.exp %82 : vector<8x32xf32>
    %cst_29 = arith.constant 1.000000e+00 : f32
    %84 = vector.broadcast %cst_29 : f32 to vector<8x32xf32>
    %85 = arith.addf %84, %83 : vector<8x32xf32>
    %86 = arith.divf %84, %85 : vector<8x32xf32>
    %87 = vector.extract_strided_slice %80 {offsets = [0, 32], sizes = [8, 32], strides = [1, 1]} : vector<8x128xf32> to vector<8x32xf32>
    %88 = arith.negf %87 : vector<8x32xf32>
    %89 = math.exp %88 : vector<8x32xf32>
    %cst_30 = arith.constant 1.000000e+00 : f32
    %90 = vector.broadcast %cst_30 : f32 to vector<8x32xf32>
    %91 = arith.addf %90, %89 : vector<8x32xf32>
    %92 = arith.divf %90, %91 : vector<8x32xf32>
    %93 = vector.extract_strided_slice %80 {offsets = [0, 64], sizes = [8, 32], strides = [1, 1]} : vector<8x128xf32> to vector<8x32xf32>
    %94 = math.tanh %93 : vector<8x32xf32>
    %95 = vector.extract_strided_slice %80 {offsets = [0, 96], sizes = [8, 32], strides = [1, 1]} : vector<8x128xf32> to vector<8x32xf32>
    %96 = arith.negf %95 : vector<8x32xf32>
    %97 = math.exp %96 : vector<8x32xf32>
    %cst_31 = arith.constant 1.000000e+00 : f32
    %98 = vector.broadcast %cst_31 : f32 to vector<8x32xf32>
    %99 = arith.addf %98, %97 : vector<8x32xf32>
    %100 = arith.divf %98, %99 : vector<8x32xf32>
    %101 = arith.mulf %92, %34 : vector<8x32xf32>
    %102 = arith.mulf %86, %94 : vector<8x32xf32>
    %103 = arith.addf %101, %102 : vector<8x32xf32>
    %104 = math.tanh %103 : vector<8x32xf32>
    %105 = arith.mulf %100, %104 : vector<8x32xf32>
    %106 = tpu.concatenate %105, %69 in 1 : vector<8x32xf32>, vector<8x32xf32> -> vector<8x64xf32>
    %c1_32 = arith.constant 1 : index
    %c0_33 = arith.constant 0 : index
    %c0_34 = arith.constant 0 : index
    %107 = vector.load %arg2[%c1_32, %c0_33, %c0_34] : memref<2x64x128xf32, #tpu.memory_space<vmem>>, vector<1x64x128xf32>
    %108 = vector.shape_cast %107 : vector<1x64x128xf32> to vector<64x128xf32>
    %cst_35 = arith.constant dense<0.000000e+00> : vector<8x128xf32>
    %109 = tpu.matmul %106, %108, %cst_35 {dimension_numbers = #tpu.dot_dimension_numbers<[1], [0], [0], [1], [0, 0, 1, 1], [], []>} : vector<8x64xf32>, vector<64x128xf32>, vector<8x128xf32> -> vector<8x128xf32>
    %c1_36 = arith.constant 1 : index
    %c0_37 = arith.constant 0 : index
    %c0_38 = arith.constant 0 : index
    %110 = vector.load %arg3[%c1_36, %c0_37, %c0_38] : memref<2x1x128xf32, #tpu.memory_space<vmem>>, vector<1x1x128xf32>
    %111 = vector.shape_cast %110 : vector<1x1x128xf32> to vector<1x128xf32>
    %112 = vector.broadcast %111 : vector<1x128xf32> to vector<8x128xf32>
    %113 = arith.addf %109, %112 : vector<8x128xf32>
    %114 = vector.extract_strided_slice %113 {offsets = [0, 0], sizes = [8, 32], strides = [1, 1]} : vector<8x128xf32> to vector<8x32xf32>
    %115 = arith.negf %114 : vector<8x32xf32>
    %116 = math.exp %115 : vector<8x32xf32>
    %cst_39 = arith.constant 1.000000e+00 : f32
    %117 = vector.broadcast %cst_39 : f32 to vector<8x32xf32>
    %118 = arith.addf %117, %116 : vector<8x32xf32>
    %119 = arith.divf %117, %118 : vector<8x32xf32>
    %120 = vector.extract_strided_slice %113 {offsets = [0, 32], sizes = [8, 32], strides = [1, 1]} : vector<8x128xf32> to vector<8x32xf32>
    %121 = arith.negf %120 : vector<8x32xf32>
    %122 = math.exp %121 : vector<8x32xf32>
    %cst_40 = arith.constant 1.000000e+00 : f32
    %123 = vector.broadcast %cst_40 : f32 to vector<8x32xf32>
    %124 = arith.addf %123, %122 : vector<8x32xf32>
    %125 = arith.divf %123, %124 : vector<8x32xf32>
    %126 = vector.extract_strided_slice %113 {offsets = [0, 64], sizes = [8, 32], strides = [1, 1]} : vector<8x128xf32> to vector<8x32xf32>
    %127 = math.tanh %126 : vector<8x32xf32>
    %128 = vector.extract_strided_slice %113 {offsets = [0, 96], sizes = [8, 32], strides = [1, 1]} : vector<8x128xf32> to vector<8x32xf32>
    %129 = arith.negf %128 : vector<8x32xf32>
    %130 = math.exp %129 : vector<8x32xf32>
    %cst_41 = arith.constant 1.000000e+00 : f32
    %131 = vector.broadcast %cst_41 : f32 to vector<8x32xf32>
    %132 = arith.addf %131, %130 : vector<8x32xf32>
    %133 = arith.divf %131, %132 : vector<8x32xf32>
    %134 = arith.mulf %125, %67 : vector<8x32xf32>
    %135 = arith.mulf %119, %127 : vector<8x32xf32>
    %136 = arith.addf %134, %135 : vector<8x32xf32>
    %137 = math.tanh %136 : vector<8x32xf32>
    %138 = arith.mulf %133, %137 : vector<8x32xf32>
    %c2_i32 = arith.constant 2 : i32
    %139 = arith.index_cast %c2_i32 : i32 to index
    %c0_42 = arith.constant 0 : index
    %c0_43 = arith.constant 0 : index
    %140 = vector.load %arg1[%139, %c0_42, %c0_43] : memref<8x8x32xf32, #tpu.memory_space<vmem>>, vector<1x8x32xf32>
    %141 = vector.shape_cast %140 : vector<1x8x32xf32> to vector<8x32xf32>
    %142 = tpu.concatenate %141, %105 in 1 : vector<8x32xf32>, vector<8x32xf32> -> vector<8x64xf32>
    %c0_44 = arith.constant 0 : index
    %c0_45 = arith.constant 0 : index
    %c0_46 = arith.constant 0 : index
    %143 = vector.load %arg2[%c0_44, %c0_45, %c0_46] : memref<2x64x128xf32, #tpu.memory_space<vmem>>, vector<1x64x128xf32>
    %144 = vector.shape_cast %143 : vector<1x64x128xf32> to vector<64x128xf32>
    %cst_47 = arith.constant dense<0.000000e+00> : vector<8x128xf32>
    %145 = tpu.matmul %142, %144, %cst_47 {dimension_numbers = #tpu.dot_dimension_numbers<[1], [0], [0], [1], [0, 0, 1, 1], [], []>} : vector<8x64xf32>, vector<64x128xf32>, vector<8x128xf32> -> vector<8x128xf32>
    %c0_48 = arith.constant 0 : index
    %c0_49 = arith.constant 0 : index
    %c0_50 = arith.constant 0 : index
    %146 = vector.load %arg3[%c0_48, %c0_49, %c0_50] : memref<2x1x128xf32, #tpu.memory_space<vmem>>, vector<1x1x128xf32>
    %147 = vector.shape_cast %146 : vector<1x1x128xf32> to vector<1x128xf32>
    %148 = vector.broadcast %147 : vector<1x128xf32> to vector<8x128xf32>
    %149 = arith.addf %145, %148 : vector<8x128xf32>
    %150 = vector.extract_strided_slice %149 {offsets = [0, 0], sizes = [8, 32], strides = [1, 1]} : vector<8x128xf32> to vector<8x32xf32>
    %151 = arith.negf %150 : vector<8x32xf32>
    %152 = math.exp %151 : vector<8x32xf32>
    %cst_51 = arith.constant 1.000000e+00 : f32
    %153 = vector.broadcast %cst_51 : f32 to vector<8x32xf32>
    %154 = arith.addf %153, %152 : vector<8x32xf32>
    %155 = arith.divf %153, %154 : vector<8x32xf32>
    %156 = vector.extract_strided_slice %149 {offsets = [0, 32], sizes = [8, 32], strides = [1, 1]} : vector<8x128xf32> to vector<8x32xf32>
    %157 = arith.negf %156 : vector<8x32xf32>
    %158 = math.exp %157 : vector<8x32xf32>
    %cst_52 = arith.constant 1.000000e+00 : f32
    %159 = vector.broadcast %cst_52 : f32 to vector<8x32xf32>
    %160 = arith.addf %159, %158 : vector<8x32xf32>
    %161 = arith.divf %159, %160 : vector<8x32xf32>
    %162 = vector.extract_strided_slice %149 {offsets = [0, 64], sizes = [8, 32], strides = [1, 1]} : vector<8x128xf32> to vector<8x32xf32>
    %163 = math.tanh %162 : vector<8x32xf32>
    %164 = vector.extract_strided_slice %149 {offsets = [0, 96], sizes = [8, 32], strides = [1, 1]} : vector<8x128xf32> to vector<8x32xf32>
    %165 = arith.negf %164 : vector<8x32xf32>
    %166 = math.exp %165 : vector<8x32xf32>
    %cst_53 = arith.constant 1.000000e+00 : f32
    %167 = vector.broadcast %cst_53 : f32 to vector<8x32xf32>
    %168 = arith.addf %167, %166 : vector<8x32xf32>
    %169 = arith.divf %167, %168 : vector<8x32xf32>
    %170 = arith.mulf %161, %103 : vector<8x32xf32>
    %171 = arith.mulf %155, %163 : vector<8x32xf32>
    %172 = arith.addf %170, %171 : vector<8x32xf32>
    %173 = math.tanh %172 : vector<8x32xf32>
    %174 = arith.mulf %169, %173 : vector<8x32xf32>
    %175 = tpu.concatenate %174, %138 in 1 : vector<8x32xf32>, vector<8x32xf32> -> vector<8x64xf32>
    %c1_54 = arith.constant 1 : index
    %c0_55 = arith.constant 0 : index
    %c0_56 = arith.constant 0 : index
    %176 = vector.load %arg2[%c1_54, %c0_55, %c0_56] : memref<2x64x128xf32, #tpu.memory_space<vmem>>, vector<1x64x128xf32>
    %177 = vector.shape_cast %176 : vector<1x64x128xf32> to vector<64x128xf32>
    %cst_57 = arith.constant dense<0.000000e+00> : vector<8x128xf32>
    %178 = tpu.matmul %175, %177, %cst_57 {dimension_numbers = #tpu.dot_dimension_numbers<[1], [0], [0], [1], [0, 0, 1, 1], [], []>} : vector<8x64xf32>, vector<64x128xf32>, vector<8x128xf32> -> vector<8x128xf32>
    %c1_58 = arith.constant 1 : index
    %c0_59 = arith.constant 0 : index
    %c0_60 = arith.constant 0 : index
    %179 = vector.load %arg3[%c1_58, %c0_59, %c0_60] : memref<2x1x128xf32, #tpu.memory_space<vmem>>, vector<1x1x128xf32>
    %180 = vector.shape_cast %179 : vector<1x1x128xf32> to vector<1x128xf32>
    %181 = vector.broadcast %180 : vector<1x128xf32> to vector<8x128xf32>
    %182 = arith.addf %178, %181 : vector<8x128xf32>
    %183 = vector.extract_strided_slice %182 {offsets = [0, 0], sizes = [8, 32], strides = [1, 1]} : vector<8x128xf32> to vector<8x32xf32>
    %184 = arith.negf %183 : vector<8x32xf32>
    %185 = math.exp %184 : vector<8x32xf32>
    %cst_61 = arith.constant 1.000000e+00 : f32
    %186 = vector.broadcast %cst_61 : f32 to vector<8x32xf32>
    %187 = arith.addf %186, %185 : vector<8x32xf32>
    %188 = arith.divf %186, %187 : vector<8x32xf32>
    %189 = vector.extract_strided_slice %182 {offsets = [0, 32], sizes = [8, 32], strides = [1, 1]} : vector<8x128xf32> to vector<8x32xf32>
    %190 = arith.negf %189 : vector<8x32xf32>
    %191 = math.exp %190 : vector<8x32xf32>
    %cst_62 = arith.constant 1.000000e+00 : f32
    %192 = vector.broadcast %cst_62 : f32 to vector<8x32xf32>
    %193 = arith.addf %192, %191 : vector<8x32xf32>
    %194 = arith.divf %192, %193 : vector<8x32xf32>
    %195 = vector.extract_strided_slice %182 {offsets = [0, 64], sizes = [8, 32], strides = [1, 1]} : vector<8x128xf32> to vector<8x32xf32>
    %196 = math.tanh %195 : vector<8x32xf32>
    %197 = vector.extract_strided_slice %182 {offsets = [0, 96], sizes = [8, 32], strides = [1, 1]} : vector<8x128xf32> to vector<8x32xf32>
    %198 = arith.negf %197 : vector<8x32xf32>
    %199 = math.exp %198 : vector<8x32xf32>
    %cst_63 = arith.constant 1.000000e+00 : f32
    %200 = vector.broadcast %cst_63 : f32 to vector<8x32xf32>
    %201 = arith.addf %200, %199 : vector<8x32xf32>
    %202 = arith.divf %200, %201 : vector<8x32xf32>
    %203 = arith.mulf %194, %136 : vector<8x32xf32>
    %204 = arith.mulf %188, %196 : vector<8x32xf32>
    %205 = arith.addf %203, %204 : vector<8x32xf32>
    %206 = math.tanh %205 : vector<8x32xf32>
    %207 = arith.mulf %202, %206 : vector<8x32xf32>
    %c3_i32 = arith.constant 3 : i32
    %208 = arith.index_cast %c3_i32 : i32 to index
    %c0_64 = arith.constant 0 : index
    %c0_65 = arith.constant 0 : index
    %209 = vector.load %arg1[%208, %c0_64, %c0_65] : memref<8x8x32xf32, #tpu.memory_space<vmem>>, vector<1x8x32xf32>
    %210 = vector.shape_cast %209 : vector<1x8x32xf32> to vector<8x32xf32>
    %211 = tpu.concatenate %210, %174 in 1 : vector<8x32xf32>, vector<8x32xf32> -> vector<8x64xf32>
    %c0_66 = arith.constant 0 : index
    %c0_67 = arith.constant 0 : index
    %c0_68 = arith.constant 0 : index
    %212 = vector.load %arg2[%c0_66, %c0_67, %c0_68] : memref<2x64x128xf32, #tpu.memory_space<vmem>>, vector<1x64x128xf32>
    %213 = vector.shape_cast %212 : vector<1x64x128xf32> to vector<64x128xf32>
    %cst_69 = arith.constant dense<0.000000e+00> : vector<8x128xf32>
    %214 = tpu.matmul %211, %213, %cst_69 {dimension_numbers = #tpu.dot_dimension_numbers<[1], [0], [0], [1], [0, 0, 1, 1], [], []>} : vector<8x64xf32>, vector<64x128xf32>, vector<8x128xf32> -> vector<8x128xf32>
    %c0_70 = arith.constant 0 : index
    %c0_71 = arith.constant 0 : index
    %c0_72 = arith.constant 0 : index
    %215 = vector.load %arg3[%c0_70, %c0_71, %c0_72] : memref<2x1x128xf32, #tpu.memory_space<vmem>>, vector<1x1x128xf32>
    %216 = vector.shape_cast %215 : vector<1x1x128xf32> to vector<1x128xf32>
    %217 = vector.broadcast %216 : vector<1x128xf32> to vector<8x128xf32>
    %218 = arith.addf %214, %217 : vector<8x128xf32>
    %219 = vector.extract_strided_slice %218 {offsets = [0, 0], sizes = [8, 32], strides = [1, 1]} : vector<8x128xf32> to vector<8x32xf32>
    %220 = arith.negf %219 : vector<8x32xf32>
    %221 = math.exp %220 : vector<8x32xf32>
    %cst_73 = arith.constant 1.000000e+00 : f32
    %222 = vector.broadcast %cst_73 : f32 to vector<8x32xf32>
    %223 = arith.addf %222, %221 : vector<8x32xf32>
    %224 = arith.divf %222, %223 : vector<8x32xf32>
    %225 = vector.extract_strided_slice %218 {offsets = [0, 32], sizes = [8, 32], strides = [1, 1]} : vector<8x128xf32> to vector<8x32xf32>
    %226 = arith.negf %225 : vector<8x32xf32>
    %227 = math.exp %226 : vector<8x32xf32>
    %cst_74 = arith.constant 1.000000e+00 : f32
    %228 = vector.broadcast %cst_74 : f32 to vector<8x32xf32>
    %229 = arith.addf %228, %227 : vector<8x32xf32>
    %230 = arith.divf %228, %229 : vector<8x32xf32>
    %231 = vector.extract_strided_slice %218 {offsets = [0, 64], sizes = [8, 32], strides = [1, 1]} : vector<8x128xf32> to vector<8x32xf32>
    %232 = math.tanh %231 : vector<8x32xf32>
    %233 = vector.extract_strided_slice %218 {offsets = [0, 96], sizes = [8, 32], strides = [1, 1]} : vector<8x128xf32> to vector<8x32xf32>
    %234 = arith.negf %233 : vector<8x32xf32>
    %235 = math.exp %234 : vector<8x32xf32>
    %cst_75 = arith.constant 1.000000e+00 : f32
    %236 = vector.broadcast %cst_75 : f32 to vector<8x32xf32>
    %237 = arith.addf %236, %235 : vector<8x32xf32>
    %238 = arith.divf %236, %237 : vector<8x32xf32>
    %239 = arith.mulf %230, %172 : vector<8x32xf32>
    %240 = arith.mulf %224, %232 : vector<8x32xf32>
    %241 = arith.addf %239, %240 : vector<8x32xf32>
    %242 = math.tanh %241 : vector<8x32xf32>
    %243 = arith.mulf %238, %242 : vector<8x32xf32>
    %244 = tpu.concatenate %243, %207 in 1 : vector<8x32xf32>, vector<8x32xf32> -> vector<8x64xf32>
    %c1_76 = arith.constant 1 : index
    %c0_77 = arith.constant 0 : index
    %c0_78 = arith.constant 0 : index
    %245 = vector.load %arg2[%c1_76, %c0_77, %c0_78] : memref<2x64x128xf32, #tpu.memory_space<vmem>>, vector<1x64x128xf32>
    %246 = vector.shape_cast %245 : vector<1x64x128xf32> to vector<64x128xf32>
    %cst_79 = arith.constant dense<0.000000e+00> : vector<8x128xf32>
    %247 = tpu.matmul %244, %246, %cst_79 {dimension_numbers = #tpu.dot_dimension_numbers<[1], [0], [0], [1], [0, 0, 1, 1], [], []>} : vector<8x64xf32>, vector<64x128xf32>, vector<8x128xf32> -> vector<8x128xf32>
    %c1_80 = arith.constant 1 : index
    %c0_81 = arith.constant 0 : index
    %c0_82 = arith.constant 0 : index
    %248 = vector.load %arg3[%c1_80, %c0_81, %c0_82] : memref<2x1x128xf32, #tpu.memory_space<vmem>>, vector<1x1x128xf32>
    %249 = vector.shape_cast %248 : vector<1x1x128xf32> to vector<1x128xf32>
    %250 = vector.broadcast %249 : vector<1x128xf32> to vector<8x128xf32>
    %251 = arith.addf %247, %250 : vector<8x128xf32>
    %252 = vector.extract_strided_slice %251 {offsets = [0, 0], sizes = [8, 32], strides = [1, 1]} : vector<8x128xf32> to vector<8x32xf32>
    %253 = arith.negf %252 : vector<8x32xf32>
    %254 = math.exp %253 : vector<8x32xf32>
    %cst_83 = arith.constant 1.000000e+00 : f32
    %255 = vector.broadcast %cst_83 : f32 to vector<8x32xf32>
    %256 = arith.addf %255, %254 : vector<8x32xf32>
    %257 = arith.divf %255, %256 : vector<8x32xf32>
    %258 = vector.extract_strided_slice %251 {offsets = [0, 32], sizes = [8, 32], strides = [1, 1]} : vector<8x128xf32> to vector<8x32xf32>
    %259 = arith.negf %258 : vector<8x32xf32>
    %260 = math.exp %259 : vector<8x32xf32>
    %cst_84 = arith.constant 1.000000e+00 : f32
    %261 = vector.broadcast %cst_84 : f32 to vector<8x32xf32>
    %262 = arith.addf %261, %260 : vector<8x32xf32>
    %263 = arith.divf %261, %262 : vector<8x32xf32>
    %264 = vector.extract_strided_slice %251 {offsets = [0, 64], sizes = [8, 32], strides = [1, 1]} : vector<8x128xf32> to vector<8x32xf32>
    %265 = math.tanh %264 : vector<8x32xf32>
    %266 = vector.extract_strided_slice %251 {offsets = [0, 96], sizes = [8, 32], strides = [1, 1]} : vector<8x128xf32> to vector<8x32xf32>
    %267 = arith.negf %266 : vector<8x32xf32>
    %268 = math.exp %267 : vector<8x32xf32>
    %cst_85 = arith.constant 1.000000e+00 : f32
    %269 = vector.broadcast %cst_85 : f32 to vector<8x32xf32>
    %270 = arith.addf %269, %268 : vector<8x32xf32>
    %271 = arith.divf %269, %270 : vector<8x32xf32>
    %272 = arith.mulf %263, %205 : vector<8x32xf32>
    %273 = arith.mulf %257, %265 : vector<8x32xf32>
    %274 = arith.addf %272, %273 : vector<8x32xf32>
    %275 = math.tanh %274 : vector<8x32xf32>
    %276 = arith.mulf %271, %275 : vector<8x32xf32>
    %c4_i32 = arith.constant 4 : i32
    %277 = arith.index_cast %c4_i32 : i32 to index
    %c0_86 = arith.constant 0 : index
    %c0_87 = arith.constant 0 : index
    %278 = vector.load %arg1[%277, %c0_86, %c0_87] : memref<8x8x32xf32, #tpu.memory_space<vmem>>, vector<1x8x32xf32>
    %279 = vector.shape_cast %278 : vector<1x8x32xf32> to vector<8x32xf32>
    %280 = tpu.concatenate %279, %243 in 1 : vector<8x32xf32>, vector<8x32xf32> -> vector<8x64xf32>
    %c0_88 = arith.constant 0 : index
    %c0_89 = arith.constant 0 : index
    %c0_90 = arith.constant 0 : index
    %281 = vector.load %arg2[%c0_88, %c0_89, %c0_90] : memref<2x64x128xf32, #tpu.memory_space<vmem>>, vector<1x64x128xf32>
    %282 = vector.shape_cast %281 : vector<1x64x128xf32> to vector<64x128xf32>
    %cst_91 = arith.constant dense<0.000000e+00> : vector<8x128xf32>
    %283 = tpu.matmul %280, %282, %cst_91 {dimension_numbers = #tpu.dot_dimension_numbers<[1], [0], [0], [1], [0, 0, 1, 1], [], []>} : vector<8x64xf32>, vector<64x128xf32>, vector<8x128xf32> -> vector<8x128xf32>
    %c0_92 = arith.constant 0 : index
    %c0_93 = arith.constant 0 : index
    %c0_94 = arith.constant 0 : index
    %284 = vector.load %arg3[%c0_92, %c0_93, %c0_94] : memref<2x1x128xf32, #tpu.memory_space<vmem>>, vector<1x1x128xf32>
    %285 = vector.shape_cast %284 : vector<1x1x128xf32> to vector<1x128xf32>
    %286 = vector.broadcast %285 : vector<1x128xf32> to vector<8x128xf32>
    %287 = arith.addf %283, %286 : vector<8x128xf32>
    %288 = vector.extract_strided_slice %287 {offsets = [0, 0], sizes = [8, 32], strides = [1, 1]} : vector<8x128xf32> to vector<8x32xf32>
    %289 = arith.negf %288 : vector<8x32xf32>
    %290 = math.exp %289 : vector<8x32xf32>
    %cst_95 = arith.constant 1.000000e+00 : f32
    %291 = vector.broadcast %cst_95 : f32 to vector<8x32xf32>
    %292 = arith.addf %291, %290 : vector<8x32xf32>
    %293 = arith.divf %291, %292 : vector<8x32xf32>
    %294 = vector.extract_strided_slice %287 {offsets = [0, 32], sizes = [8, 32], strides = [1, 1]} : vector<8x128xf32> to vector<8x32xf32>
    %295 = arith.negf %294 : vector<8x32xf32>
    %296 = math.exp %295 : vector<8x32xf32>
    %cst_96 = arith.constant 1.000000e+00 : f32
    %297 = vector.broadcast %cst_96 : f32 to vector<8x32xf32>
    %298 = arith.addf %297, %296 : vector<8x32xf32>
    %299 = arith.divf %297, %298 : vector<8x32xf32>
    %300 = vector.extract_strided_slice %287 {offsets = [0, 64], sizes = [8, 32], strides = [1, 1]} : vector<8x128xf32> to vector<8x32xf32>
    %301 = math.tanh %300 : vector<8x32xf32>
    %302 = vector.extract_strided_slice %287 {offsets = [0, 96], sizes = [8, 32], strides = [1, 1]} : vector<8x128xf32> to vector<8x32xf32>
    %303 = arith.negf %302 : vector<8x32xf32>
    %304 = math.exp %303 : vector<8x32xf32>
    %cst_97 = arith.constant 1.000000e+00 : f32
    %305 = vector.broadcast %cst_97 : f32 to vector<8x32xf32>
    %306 = arith.addf %305, %304 : vector<8x32xf32>
    %307 = arith.divf %305, %306 : vector<8x32xf32>
    %308 = arith.mulf %299, %241 : vector<8x32xf32>
    %309 = arith.mulf %293, %301 : vector<8x32xf32>
    %310 = arith.addf %308, %309 : vector<8x32xf32>
    %311 = math.tanh %310 : vector<8x32xf32>
    %312 = arith.mulf %307, %311 : vector<8x32xf32>
    %313 = tpu.concatenate %312, %276 in 1 : vector<8x32xf32>, vector<8x32xf32> -> vector<8x64xf32>
    %c1_98 = arith.constant 1 : index
    %c0_99 = arith.constant 0 : index
    %c0_100 = arith.constant 0 : index
    %314 = vector.load %arg2[%c1_98, %c0_99, %c0_100] : memref<2x64x128xf32, #tpu.memory_space<vmem>>, vector<1x64x128xf32>
    %315 = vector.shape_cast %314 : vector<1x64x128xf32> to vector<64x128xf32>
    %cst_101 = arith.constant dense<0.000000e+00> : vector<8x128xf32>
    %316 = tpu.matmul %313, %315, %cst_101 {dimension_numbers = #tpu.dot_dimension_numbers<[1], [0], [0], [1], [0, 0, 1, 1], [], []>} : vector<8x64xf32>, vector<64x128xf32>, vector<8x128xf32> -> vector<8x128xf32>
    %c1_102 = arith.constant 1 : index
    %c0_103 = arith.constant 0 : index
    %c0_104 = arith.constant 0 : index
    %317 = vector.load %arg3[%c1_102, %c0_103, %c0_104] : memref<2x1x128xf32, #tpu.memory_space<vmem>>, vector<1x1x128xf32>
    %318 = vector.shape_cast %317 : vector<1x1x128xf32> to vector<1x128xf32>
    %319 = vector.broadcast %318 : vector<1x128xf32> to vector<8x128xf32>
    %320 = arith.addf %316, %319 : vector<8x128xf32>
    %321 = vector.extract_strided_slice %320 {offsets = [0, 0], sizes = [8, 32], strides = [1, 1]} : vector<8x128xf32> to vector<8x32xf32>
    %322 = arith.negf %321 : vector<8x32xf32>
    %323 = math.exp %322 : vector<8x32xf32>
    %cst_105 = arith.constant 1.000000e+00 : f32
    %324 = vector.broadcast %cst_105 : f32 to vector<8x32xf32>
    %325 = arith.addf %324, %323 : vector<8x32xf32>
    %326 = arith.divf %324, %325 : vector<8x32xf32>
    %327 = vector.extract_strided_slice %320 {offsets = [0, 32], sizes = [8, 32], strides = [1, 1]} : vector<8x128xf32> to vector<8x32xf32>
    %328 = arith.negf %327 : vector<8x32xf32>
    %329 = math.exp %328 : vector<8x32xf32>
    %cst_106 = arith.constant 1.000000e+00 : f32
    %330 = vector.broadcast %cst_106 : f32 to vector<8x32xf32>
    %331 = arith.addf %330, %329 : vector<8x32xf32>
    %332 = arith.divf %330, %331 : vector<8x32xf32>
    %333 = vector.extract_strided_slice %320 {offsets = [0, 64], sizes = [8, 32], strides = [1, 1]} : vector<8x128xf32> to vector<8x32xf32>
    %334 = math.tanh %333 : vector<8x32xf32>
    %335 = vector.extract_strided_slice %320 {offsets = [0, 96], sizes = [8, 32], strides = [1, 1]} : vector<8x128xf32> to vector<8x32xf32>
    %336 = arith.negf %335 : vector<8x32xf32>
    %337 = math.exp %336 : vector<8x32xf32>
    %cst_107 = arith.constant 1.000000e+00 : f32
    %338 = vector.broadcast %cst_107 : f32 to vector<8x32xf32>
    %339 = arith.addf %338, %337 : vector<8x32xf32>
    %340 = arith.divf %338, %339 : vector<8x32xf32>
    %341 = arith.mulf %332, %274 : vector<8x32xf32>
    %342 = arith.mulf %326, %334 : vector<8x32xf32>
    %343 = arith.addf %341, %342 : vector<8x32xf32>
    %344 = math.tanh %343 : vector<8x32xf32>
    %345 = arith.mulf %340, %344 : vector<8x32xf32>
    %c5_i32 = arith.constant 5 : i32
    %346 = arith.index_cast %c5_i32 : i32 to index
    %c0_108 = arith.constant 0 : index
    %c0_109 = arith.constant 0 : index
    %347 = vector.load %arg1[%346, %c0_108, %c0_109] : memref<8x8x32xf32, #tpu.memory_space<vmem>>, vector<1x8x32xf32>
    %348 = vector.shape_cast %347 : vector<1x8x32xf32> to vector<8x32xf32>
    %349 = tpu.concatenate %348, %312 in 1 : vector<8x32xf32>, vector<8x32xf32> -> vector<8x64xf32>
    %c0_110 = arith.constant 0 : index
    %c0_111 = arith.constant 0 : index
    %c0_112 = arith.constant 0 : index
    %350 = vector.load %arg2[%c0_110, %c0_111, %c0_112] : memref<2x64x128xf32, #tpu.memory_space<vmem>>, vector<1x64x128xf32>
    %351 = vector.shape_cast %350 : vector<1x64x128xf32> to vector<64x128xf32>
    %cst_113 = arith.constant dense<0.000000e+00> : vector<8x128xf32>
    %352 = tpu.matmul %349, %351, %cst_113 {dimension_numbers = #tpu.dot_dimension_numbers<[1], [0], [0], [1], [0, 0, 1, 1], [], []>} : vector<8x64xf32>, vector<64x128xf32>, vector<8x128xf32> -> vector<8x128xf32>
    %c0_114 = arith.constant 0 : index
    %c0_115 = arith.constant 0 : index
    %c0_116 = arith.constant 0 : index
    %353 = vector.load %arg3[%c0_114, %c0_115, %c0_116] : memref<2x1x128xf32, #tpu.memory_space<vmem>>, vector<1x1x128xf32>
    %354 = vector.shape_cast %353 : vector<1x1x128xf32> to vector<1x128xf32>
    %355 = vector.broadcast %354 : vector<1x128xf32> to vector<8x128xf32>
    %356 = arith.addf %352, %355 : vector<8x128xf32>
    %357 = vector.extract_strided_slice %356 {offsets = [0, 0], sizes = [8, 32], strides = [1, 1]} : vector<8x128xf32> to vector<8x32xf32>
    %358 = arith.negf %357 : vector<8x32xf32>
    %359 = math.exp %358 : vector<8x32xf32>
    %cst_117 = arith.constant 1.000000e+00 : f32
    %360 = vector.broadcast %cst_117 : f32 to vector<8x32xf32>
    %361 = arith.addf %360, %359 : vector<8x32xf32>
    %362 = arith.divf %360, %361 : vector<8x32xf32>
    %363 = vector.extract_strided_slice %356 {offsets = [0, 32], sizes = [8, 32], strides = [1, 1]} : vector<8x128xf32> to vector<8x32xf32>
    %364 = arith.negf %363 : vector<8x32xf32>
    %365 = math.exp %364 : vector<8x32xf32>
    %cst_118 = arith.constant 1.000000e+00 : f32
    %366 = vector.broadcast %cst_118 : f32 to vector<8x32xf32>
    %367 = arith.addf %366, %365 : vector<8x32xf32>
    %368 = arith.divf %366, %367 : vector<8x32xf32>
    %369 = vector.extract_strided_slice %356 {offsets = [0, 64], sizes = [8, 32], strides = [1, 1]} : vector<8x128xf32> to vector<8x32xf32>
    %370 = math.tanh %369 : vector<8x32xf32>
    %371 = vector.extract_strided_slice %356 {offsets = [0, 96], sizes = [8, 32], strides = [1, 1]} : vector<8x128xf32> to vector<8x32xf32>
    %372 = arith.negf %371 : vector<8x32xf32>
    %373 = math.exp %372 : vector<8x32xf32>
    %cst_119 = arith.constant 1.000000e+00 : f32
    %374 = vector.broadcast %cst_119 : f32 to vector<8x32xf32>
    %375 = arith.addf %374, %373 : vector<8x32xf32>
    %376 = arith.divf %374, %375 : vector<8x32xf32>
    %377 = arith.mulf %368, %310 : vector<8x32xf32>
    %378 = arith.mulf %362, %370 : vector<8x32xf32>
    %379 = arith.addf %377, %378 : vector<8x32xf32>
    %380 = math.tanh %379 : vector<8x32xf32>
    %381 = arith.mulf %376, %380 : vector<8x32xf32>
    %382 = tpu.concatenate %381, %345 in 1 : vector<8x32xf32>, vector<8x32xf32> -> vector<8x64xf32>
    %c1_120 = arith.constant 1 : index
    %c0_121 = arith.constant 0 : index
    %c0_122 = arith.constant 0 : index
    %383 = vector.load %arg2[%c1_120, %c0_121, %c0_122] : memref<2x64x128xf32, #tpu.memory_space<vmem>>, vector<1x64x128xf32>
    %384 = vector.shape_cast %383 : vector<1x64x128xf32> to vector<64x128xf32>
    %cst_123 = arith.constant dense<0.000000e+00> : vector<8x128xf32>
    %385 = tpu.matmul %382, %384, %cst_123 {dimension_numbers = #tpu.dot_dimension_numbers<[1], [0], [0], [1], [0, 0, 1, 1], [], []>} : vector<8x64xf32>, vector<64x128xf32>, vector<8x128xf32> -> vector<8x128xf32>
    %c1_124 = arith.constant 1 : index
    %c0_125 = arith.constant 0 : index
    %c0_126 = arith.constant 0 : index
    %386 = vector.load %arg3[%c1_124, %c0_125, %c0_126] : memref<2x1x128xf32, #tpu.memory_space<vmem>>, vector<1x1x128xf32>
    %387 = vector.shape_cast %386 : vector<1x1x128xf32> to vector<1x128xf32>
    %388 = vector.broadcast %387 : vector<1x128xf32> to vector<8x128xf32>
    %389 = arith.addf %385, %388 : vector<8x128xf32>
    %390 = vector.extract_strided_slice %389 {offsets = [0, 0], sizes = [8, 32], strides = [1, 1]} : vector<8x128xf32> to vector<8x32xf32>
    %391 = arith.negf %390 : vector<8x32xf32>
    %392 = math.exp %391 : vector<8x32xf32>
    %cst_127 = arith.constant 1.000000e+00 : f32
    %393 = vector.broadcast %cst_127 : f32 to vector<8x32xf32>
    %394 = arith.addf %393, %392 : vector<8x32xf32>
    %395 = arith.divf %393, %394 : vector<8x32xf32>
    %396 = vector.extract_strided_slice %389 {offsets = [0, 32], sizes = [8, 32], strides = [1, 1]} : vector<8x128xf32> to vector<8x32xf32>
    %397 = arith.negf %396 : vector<8x32xf32>
    %398 = math.exp %397 : vector<8x32xf32>
    %cst_128 = arith.constant 1.000000e+00 : f32
    %399 = vector.broadcast %cst_128 : f32 to vector<8x32xf32>
    %400 = arith.addf %399, %398 : vector<8x32xf32>
    %401 = arith.divf %399, %400 : vector<8x32xf32>
    %402 = vector.extract_strided_slice %389 {offsets = [0, 64], sizes = [8, 32], strides = [1, 1]} : vector<8x128xf32> to vector<8x32xf32>
    %403 = math.tanh %402 : vector<8x32xf32>
    %404 = vector.extract_strided_slice %389 {offsets = [0, 96], sizes = [8, 32], strides = [1, 1]} : vector<8x128xf32> to vector<8x32xf32>
    %405 = arith.negf %404 : vector<8x32xf32>
    %406 = math.exp %405 : vector<8x32xf32>
    %cst_129 = arith.constant 1.000000e+00 : f32
    %407 = vector.broadcast %cst_129 : f32 to vector<8x32xf32>
    %408 = arith.addf %407, %406 : vector<8x32xf32>
    %409 = arith.divf %407, %408 : vector<8x32xf32>
    %410 = arith.mulf %401, %343 : vector<8x32xf32>
    %411 = arith.mulf %395, %403 : vector<8x32xf32>
    %412 = arith.addf %410, %411 : vector<8x32xf32>
    %413 = math.tanh %412 : vector<8x32xf32>
    %414 = arith.mulf %409, %413 : vector<8x32xf32>
    %c6_i32 = arith.constant 6 : i32
    %415 = arith.index_cast %c6_i32 : i32 to index
    %c0_130 = arith.constant 0 : index
    %c0_131 = arith.constant 0 : index
    %416 = vector.load %arg1[%415, %c0_130, %c0_131] : memref<8x8x32xf32, #tpu.memory_space<vmem>>, vector<1x8x32xf32>
    %417 = vector.shape_cast %416 : vector<1x8x32xf32> to vector<8x32xf32>
    %418 = tpu.concatenate %417, %381 in 1 : vector<8x32xf32>, vector<8x32xf32> -> vector<8x64xf32>
    %c0_132 = arith.constant 0 : index
    %c0_133 = arith.constant 0 : index
    %c0_134 = arith.constant 0 : index
    %419 = vector.load %arg2[%c0_132, %c0_133, %c0_134] : memref<2x64x128xf32, #tpu.memory_space<vmem>>, vector<1x64x128xf32>
    %420 = vector.shape_cast %419 : vector<1x64x128xf32> to vector<64x128xf32>
    %cst_135 = arith.constant dense<0.000000e+00> : vector<8x128xf32>
    %421 = tpu.matmul %418, %420, %cst_135 {dimension_numbers = #tpu.dot_dimension_numbers<[1], [0], [0], [1], [0, 0, 1, 1], [], []>} : vector<8x64xf32>, vector<64x128xf32>, vector<8x128xf32> -> vector<8x128xf32>
    %c0_136 = arith.constant 0 : index
    %c0_137 = arith.constant 0 : index
    %c0_138 = arith.constant 0 : index
    %422 = vector.load %arg3[%c0_136, %c0_137, %c0_138] : memref<2x1x128xf32, #tpu.memory_space<vmem>>, vector<1x1x128xf32>
    %423 = vector.shape_cast %422 : vector<1x1x128xf32> to vector<1x128xf32>
    %424 = vector.broadcast %423 : vector<1x128xf32> to vector<8x128xf32>
    %425 = arith.addf %421, %424 : vector<8x128xf32>
    %426 = vector.extract_strided_slice %425 {offsets = [0, 0], sizes = [8, 32], strides = [1, 1]} : vector<8x128xf32> to vector<8x32xf32>
    %427 = arith.negf %426 : vector<8x32xf32>
    %428 = math.exp %427 : vector<8x32xf32>
    %cst_139 = arith.constant 1.000000e+00 : f32
    %429 = vector.broadcast %cst_139 : f32 to vector<8x32xf32>
    %430 = arith.addf %429, %428 : vector<8x32xf32>
    %431 = arith.divf %429, %430 : vector<8x32xf32>
    %432 = vector.extract_strided_slice %425 {offsets = [0, 32], sizes = [8, 32], strides = [1, 1]} : vector<8x128xf32> to vector<8x32xf32>
    %433 = arith.negf %432 : vector<8x32xf32>
    %434 = math.exp %433 : vector<8x32xf32>
    %cst_140 = arith.constant 1.000000e+00 : f32
    %435 = vector.broadcast %cst_140 : f32 to vector<8x32xf32>
    %436 = arith.addf %435, %434 : vector<8x32xf32>
    %437 = arith.divf %435, %436 : vector<8x32xf32>
    %438 = vector.extract_strided_slice %425 {offsets = [0, 64], sizes = [8, 32], strides = [1, 1]} : vector<8x128xf32> to vector<8x32xf32>
    %439 = math.tanh %438 : vector<8x32xf32>
    %440 = vector.extract_strided_slice %425 {offsets = [0, 96], sizes = [8, 32], strides = [1, 1]} : vector<8x128xf32> to vector<8x32xf32>
    %441 = arith.negf %440 : vector<8x32xf32>
    %442 = math.exp %441 : vector<8x32xf32>
    %cst_141 = arith.constant 1.000000e+00 : f32
    %443 = vector.broadcast %cst_141 : f32 to vector<8x32xf32>
    %444 = arith.addf %443, %442 : vector<8x32xf32>
    %445 = arith.divf %443, %444 : vector<8x32xf32>
    %446 = arith.mulf %437, %379 : vector<8x32xf32>
    %447 = arith.mulf %431, %439 : vector<8x32xf32>
    %448 = arith.addf %446, %447 : vector<8x32xf32>
    %449 = math.tanh %448 : vector<8x32xf32>
    %450 = arith.mulf %445, %449 : vector<8x32xf32>
    %451 = tpu.concatenate %450, %414 in 1 : vector<8x32xf32>, vector<8x32xf32> -> vector<8x64xf32>
    %c1_142 = arith.constant 1 : index
    %c0_143 = arith.constant 0 : index
    %c0_144 = arith.constant 0 : index
    %452 = vector.load %arg2[%c1_142, %c0_143, %c0_144] : memref<2x64x128xf32, #tpu.memory_space<vmem>>, vector<1x64x128xf32>
    %453 = vector.shape_cast %452 : vector<1x64x128xf32> to vector<64x128xf32>
    %cst_145 = arith.constant dense<0.000000e+00> : vector<8x128xf32>
    %454 = tpu.matmul %451, %453, %cst_145 {dimension_numbers = #tpu.dot_dimension_numbers<[1], [0], [0], [1], [0, 0, 1, 1], [], []>} : vector<8x64xf32>, vector<64x128xf32>, vector<8x128xf32> -> vector<8x128xf32>
    %c1_146 = arith.constant 1 : index
    %c0_147 = arith.constant 0 : index
    %c0_148 = arith.constant 0 : index
    %455 = vector.load %arg3[%c1_146, %c0_147, %c0_148] : memref<2x1x128xf32, #tpu.memory_space<vmem>>, vector<1x1x128xf32>
    %456 = vector.shape_cast %455 : vector<1x1x128xf32> to vector<1x128xf32>
    %457 = vector.broadcast %456 : vector<1x128xf32> to vector<8x128xf32>
    %458 = arith.addf %454, %457 : vector<8x128xf32>
    %459 = vector.extract_strided_slice %458 {offsets = [0, 0], sizes = [8, 32], strides = [1, 1]} : vector<8x128xf32> to vector<8x32xf32>
    %460 = arith.negf %459 : vector<8x32xf32>
    %461 = math.exp %460 : vector<8x32xf32>
    %cst_149 = arith.constant 1.000000e+00 : f32
    %462 = vector.broadcast %cst_149 : f32 to vector<8x32xf32>
    %463 = arith.addf %462, %461 : vector<8x32xf32>
    %464 = arith.divf %462, %463 : vector<8x32xf32>
    %465 = vector.extract_strided_slice %458 {offsets = [0, 32], sizes = [8, 32], strides = [1, 1]} : vector<8x128xf32> to vector<8x32xf32>
    %466 = arith.negf %465 : vector<8x32xf32>
    %467 = math.exp %466 : vector<8x32xf32>
    %cst_150 = arith.constant 1.000000e+00 : f32
    %468 = vector.broadcast %cst_150 : f32 to vector<8x32xf32>
    %469 = arith.addf %468, %467 : vector<8x32xf32>
    %470 = arith.divf %468, %469 : vector<8x32xf32>
    %471 = vector.extract_strided_slice %458 {offsets = [0, 64], sizes = [8, 32], strides = [1, 1]} : vector<8x128xf32> to vector<8x32xf32>
    %472 = math.tanh %471 : vector<8x32xf32>
    %473 = vector.extract_strided_slice %458 {offsets = [0, 96], sizes = [8, 32], strides = [1, 1]} : vector<8x128xf32> to vector<8x32xf32>
    %474 = arith.negf %473 : vector<8x32xf32>
    %475 = math.exp %474 : vector<8x32xf32>
    %cst_151 = arith.constant 1.000000e+00 : f32
    %476 = vector.broadcast %cst_151 : f32 to vector<8x32xf32>
    %477 = arith.addf %476, %475 : vector<8x32xf32>
    %478 = arith.divf %476, %477 : vector<8x32xf32>
    %479 = arith.mulf %470, %412 : vector<8x32xf32>
    %480 = arith.mulf %464, %472 : vector<8x32xf32>
    %481 = arith.addf %479, %480 : vector<8x32xf32>
    %482 = math.tanh %481 : vector<8x32xf32>
    %483 = arith.mulf %478, %482 : vector<8x32xf32>
    %c7_i32 = arith.constant 7 : i32
    %484 = tpu.concatenate %450, %448, %483, %481 in 1 : vector<8x32xf32>, vector<8x32xf32>, vector<8x32xf32>, vector<8x32xf32> -> vector<8x128xf32>
    %c0_152 = arith.constant 0 : index
    %c0_153 = arith.constant 0 : index
    %485 = vector.load %arg4[%c0_152, %c0_153] : memref<128x128xf32, #tpu.memory_space<vmem>>, vector<128x128xf32>
    %cst_154 = arith.constant dense<0.000000e+00> : vector<8x128xf32>
    %486 = tpu.matmul %484, %485, %cst_154 {dimension_numbers = #tpu.dot_dimension_numbers<[1], [0], [0], [1], [0, 0, 1, 1], [], []>} : vector<8x128xf32>, vector<128x128xf32>, vector<8x128xf32> -> vector<8x128xf32>
    %c0_155 = arith.constant 0 : index
    %c0_156 = arith.constant 0 : index
    %487 = vector.load %arg5[%c0_155, %c0_156] : memref<1x128xf32, #tpu.memory_space<vmem>>, vector<1x128xf32>
    %488 = vector.broadcast %487 : vector<1x128xf32> to vector<8x128xf32>
    %489 = arith.addf %486, %488 : vector<8x128xf32>
    %c0_157 = arith.constant 0 : index
    %c0_158 = arith.constant 0 : index
    %490 = vector.load %arg6[%c0_157, %c0_158] : memref<8x128xf32, #tpu.memory_space<vmem>>, vector<8x128xf32>
    tpu.vector_store %arg6[%c0_157, %c0_158], %489 {strides = array<i32>} : memref<8x128xf32, #tpu.memory_space<vmem>>, vector<8x128xf32>,
    return
  }
  func.func @transform_0(%arg0: i32) -> (i32, i32, i32) {
    %c0_i32 = arith.constant 0 : i32
    %c0_i32_0 = arith.constant 0 : i32
    %c0_i32_1 = arith.constant 0 : i32
    %c0_i32_2 = arith.constant 0 : i32
    return %c0_i32, %c0_i32_0, %c0_i32_1 : i32, i32, i32
  }
  func.func @transform_1(%arg0: i32) -> (i32, i32, i32) {
    %c0_i32 = arith.constant 0 : i32
    %c0_i32_0 = arith.constant 0 : i32
    %c0_i32_1 = arith.constant 0 : i32
    %c0_i32_2 = arith.constant 0 : i32
    return %c0_i32, %c0_i32_0, %c0_i32_1 : i32, i32, i32
  }
  func.func @transform_2(%arg0: i32) -> (i32, i32, i32) {
    %c0_i32 = arith.constant 0 : i32
    %c0_i32_0 = arith.constant 0 : i32
    %c0_i32_1 = arith.constant 0 : i32
    %c0_i32_2 = arith.constant 0 : i32
    return %c0_i32, %c0_i32_0, %c0_i32_1 : i32, i32, i32
  }
  func.func @transform_3(%arg0: i32) -> (i32, i32) {
    %c0_i32 = arith.constant 0 : i32
    %c0_i32_0 = arith.constant 0 : i32
    %c0_i32_1 = arith.constant 0 : i32
    return %c0_i32, %c0_i32_0 : i32, i32
  }
  func.func @transform_4(%arg0: i32) -> (i32, i32) {
    %c0_i32 = arith.constant 0 : i32
    %c0_i32_0 = arith.constant 0 : i32
    %c0_i32_1 = arith.constant 0 : i32
    return %c0_i32, %c0_i32_0 : i32, i32
  }
  func.func @transform_5(%arg0: i32) -> (i32, i32) {
    %c0_i32 = arith.constant 0 : i32
    %c0_i32_0 = arith.constant 0 : i32
    %c0_i32_1 = arith.constant 0 : i32
    return %c0_i32, %c0_i32_0 : i32, i32
  }
}

</mosaic_0001>

<llo_original>
// kernel: tpu_custom_call.1
$region0: #{tpu_custom_call.1}
  #allocation0 [shape = 'u32[]', space=smem, size = 0x4, offset = 0x4, fixed_abs, tag = 'smem constant byte address 0x4 - core index']
  #allocation1 [shape = 'u32[144,128]{1,0:T(1,128)}', space=vmem, size = 0x12000, scoped, tag = 'internal scratch']
  %s0 = inlined_call_operand.hbm [shape: f32[8,8,32], index: 0, kind: input, shape index: {}]
  %s1 = inlined_call_operand.hbm [shape: f32[2,64,128], index: 1, kind: input, shape index: {}]
  %s2 = inlined_call_operand.vmem [shape: f32[2,1,128], index: 2, kind: input, shape index: {}]
  %s3 = inlined_call_operand.hbm [shape: f32[128,128], index: 3, kind: input, shape index: {}]
  %s4 = inlined_call_operand.vmem [shape: f32[1,128], index: 4, kind: input, shape index: {}]
  %s5 = inlined_call_operand.hbm [shape: f32[8,128], index: 5, kind: output, shape index: {}]
  %s6 = sld [smem:[#allocation0]]
  $region42: #{tpu_custom_call.1} parent=0
    _
  %s8 = ssub.s32 1, %s6
  %s9 = scalar_select 0, %s8, %s6
  $region1: #{tpu_custom_call.1} parent=0
    #allocation2 [shape = 'u8[32768]{0}', space=vmem, size = 0x8000, scoped, tag = 'input window, operand 0, single buffered']
    #allocation3 [shape = 's32[1]{0}', space=sflag, size = 0x4, scoped, tag = 'scoped memory for tpu_custom_call.1']
    #allocation4 [shape = 's32[1]{0}', space=sflag, size = 0x4, scoped, tag = 'scoped memory for tpu_custom_call.1']
    #allocation5 [shape = 'u8[65536]{0}', space=vmem, size = 0x10000, scoped, tag = 'input window, operand 1, single buffered']
    #allocation6 [shape = 's32[1]{0}', space=sflag, size = 0x4, scoped, tag = 'scoped memory for tpu_custom_call.1']
    #allocation7 [shape = 'u8[65536]{0}', space=vmem, size = 0x10000, scoped, tag = 'input window, operand 3, single buffered']
    #allocation8 [shape = 'u8[4096]{0}', space=vmem, size = 0x1000, scoped, tag = 'output window, operand 0, single buffered']
    %10 = vsyncpa [#allocation3], 0
    %11 = vsyncpa [#allocation6], 0
    %12 = vsyncpa [#allocation4], 0
    // Predicated region
    $region2: #{tpu_custom_call.1} parent=1 // pred_check
      _
    $region3: #{tpu_custom_call.1} parent=1 // pred_check_branch
      %14 = sbr.rel (0) target = $region5
    $region4: #{tpu_custom_call.1} parent=1 // pred_region
      %s16 = ssub.s32 1024, 1024
      %17 = vsyncadd [#allocation3], %s16
      %s18 = sshll.u32 [#allocation2], 4
      %s19 = int_to_ptr.vmem [resolvable:$true] %s18
      %24 = dma.hbm_to_vmem [thread:$0]  %s0, 1024, %s19, [#allocation3], 128, 128, 8
    $region5: #{tpu_custom_call.1} parent=1 // pred_fallthru
      _
    // Predicated region
    $region6: #{tpu_custom_call.1} parent=1 // pred_check
      _
    $region7: #{tpu_custom_call.1} parent=1 // pred_check_branch
      %26 = sbr.rel (0) target = $region9
    $region8: #{tpu_custom_call.1} parent=1 // pred_region
      %s28 = ssub.s32 2048, 2048
      %29 = vsyncadd [#allocation6], %s28
      %s30 = sshll.u32 [#allocation5], 4
      %s31 = int_to_ptr.vmem [resolvable:$true] %s30
      %36 = dma.hbm_to_vmem [thread:$0]  %s1, 2048, %s31, [#allocation6], 128, 128, 8
    $region9: #{tpu_custom_call.1} parent=1 // pred_fallthru
      _
    // Predicated region
    $region10: #{tpu_custom_call.1} parent=1 // pred_check
      _
    $region11: #{tpu_custom_call.1} parent=1 // pred_check_branch
      %38 = sbr.rel (0) target = $region13
    $region12: #{tpu_custom_call.1} parent=1 // pred_region
      _
    $region13: #{tpu_custom_call.1} parent=1 // pred_fallthru
      _
    // Predicated region
    $region14: #{tpu_custom_call.1} parent=1 // pred_check
      _
    $region15: #{tpu_custom_call.1} parent=1 // pred_check_branch
      %40 = sbr.rel (0) target = $region17
    $region16: #{tpu_custom_call.1} parent=1 // pred_region
      %s42 = ssub.s32 2048, 2048
      %43 = vsyncadd [#allocation6], %s42
      %s44 = sshll.u32 [#allocation7], 4
      %s45 = int_to_ptr.vmem [resolvable:$true] %s44
      %50 = dma.hbm_to_vmem [thread:$0]  %s3, 2048, %s45, [#allocation6], 128, 128, 8
    $region17: #{tpu_custom_call.1} parent=1 // pred_fallthru
      _
    // Predicated region
    $region18: #{tpu_custom_call.1} parent=1 // pred_check
      _
    $region19: #{tpu_custom_call.1} parent=1 // pred_check_branch
      %52 = sbr.rel (0) target = $region21
    $region20: #{tpu_custom_call.1} parent=1 // pred_region
      _
    $region21: #{tpu_custom_call.1} parent=1 // pred_fallthru
      _
    // Predicated region
    $region22: #{tpu_custom_call.1} parent=1 // pred_check
      _
    $region23: #{tpu_custom_call.1} parent=1 // pred_check_branch
      %54 = sbr.rel (0) target = $region25
    $region24: #{tpu_custom_call.1} parent=1 // pred_region
      %55 = dma.done [#allocation3], 1024
    $region25: #{tpu_custom_call.1} parent=1 // pred_fallthru
      _
    // Predicated region
    $region26: #{tpu_custom_call.1} parent=1 // pred_check
      _
    $region27: #{tpu_custom_call.1} parent=1 // pred_check_branch
      %57 = sbr.rel (0) target = $region29
    $region28: #{tpu_custom_call.1} parent=1 // pred_region
      %58 = dma.done [#allocation6], 2048
    $region29: #{tpu_custom_call.1} parent=1 // pred_fallthru
      _
    // Predicated region
    $region30: #{tpu_custom_call.1} parent=1 // pred_check
      _
    $region31: #{tpu_custom_call.1} parent=1 // pred_check_branch
      %60 = sbr.rel (0) target = $region33
    $region32: #{tpu_custom_call.1} parent=1 // pred_region
      %61 = dma.done [#allocation6], 2048
    $region33: #{tpu_custom_call.1} parent=1 // pred_fallthru
      _
    %v62 = vld [vmem:[#allocation2] sm:$0xff]
    %vm63 = vcmask 261120
    %v64 = vsel %vm63, %v62, 0.0
    %v65 = vld [vmem:[#allocation5] sm:$0xff]
    %v66 = vld [vmem:[#allocation5 + $0x8] sm:$0xff]
    %v67 = vld [vmem:[#allocation5 + $0x10] sm:$0xff]
    %v68 = vld [vmem:[#allocation5 + $0x18] sm:$0xff]
    %v69 = vld [vmem:[#allocation5 + $0x20] sm:$0xff]
    %v70 = vld [vmem:[#allocation5 + $0x28] sm:$0xff]
    %v71 = vld [vmem:[#allocation5 + $0x30] sm:$0xff]
    %v72 = vld [vmem:[#allocation5 + $0x38] sm:$0xff]
    %v73 = vld [vmem:[%s2] sm:$0x1]
    %v75 = vlaneseq
    %v76 = vshrl.u32 %v75, 7
    %v77 = vsub.s32 0, %v76
    %v78 = vrot.slane %v73, %v77
    %vm80 = vcmask 523264
    %v82 = vsel %vm80, %v64, 0
    %84 = vmatprep.subr.mxu0 0.0
    %85 = vmatpush1.msra.mxu0 0.0
    %86 = vmatprep.subr.mxu0 0.0
    %87 = vmatpush1.msra.mxu0 0.0
    %88 = vmatprep.subr.mxu0 0.0
    %89 = vmatpush1.msra.mxu0 0.0
    %90 = vmatprep.subr.mxu0 0.0
    %91 = vmatpush1.msra.mxu0 0.0
    %92 = vmatprep.subr.mxu0 0.0
    %93 = vmatpush1.msra.mxu0 0.0
    %94 = vmatprep.subr.mxu0 0.0
    %95 = vmatpush1.msra.mxu0 0.0
    %96 = vmatprep.subr.mxu0 0.0
    %97 = vmatpush1.msra.mxu0 0.0
    %98 = vmatprep.subr.mxu0 0.0
    %99 = vmatpush1.msra.mxu0 0.0
    %100 = vmatprep.subr.mxu0 0.0
    %101 = vmatpush1.msra.mxu0 %v72
    %102 = vmatprep.subr.mxu0 0.0
    %103 = vmatpush1.msra.mxu0 %v71
    %104 = vmatprep.subr.mxu0 0.0
    %105 = vmatpush1.msra.mxu0 %v70
    %106 = vmatprep.subr.mxu0 0.0
    %107 = vmatpush1.msra.mxu0 %v69
    %108 = vmatprep.subr.mxu0 0.0
    %109 = vmatpush1.msra.mxu0 %v68
    %110 = vmatprep.subr.mxu0 0.0
    %111 = vmatpush1.msra.mxu0 %v67
    %112 = vmatprep.subr.mxu0 0.0
    %113 = vmatpush1.msra.mxu0 %v66
    %114 = vmatprep.subr.mxu0 0.0
    %115 = vmatpush1.msra.mxu0 %v65
    %116 = vmatprep.subr.mxu0 0.0
    %117 = vmatpush2.msra.mxu0 0.0
    %118 = vmatprep.subr.mxu0 0.0
    %119 = vmatpush2.msra.mxu0 0.0
    %120 = vmatprep.subr.mxu0 0.0
    %121 = vmatpush2.msra.mxu0 0.0
    %122 = vmatprep.subr.mxu0 0.0
    %123 = vmatpush2.msra.mxu0 0.0
    %124 = vmatprep.subr.mxu0 0.0
    %125 = vmatpush2.msra.mxu0 0.0
    %126 = vmatprep.subr.mxu0 0.0
    %127 = vmatpush2.msra.mxu0 0.0
    %128 = vmatprep.subr.mxu0 0.0
    %129 = vmatpush2.msra.mxu0 0.0
    %130 = vmatprep.subr.mxu0 0.0
    %131 = vmatpush2.msra.mxu0 0.0
    %132 = vmatprep.subr.mxu0 0.0
    %133 = vmatpush2.msra.mxu0 0.0
    %134 = vmatprep.subr.mxu0 0.0
    %135 = vmatpush2.msra.mxu0 0.0
    %136 = vmatprep.subr.mxu0 0.0
    %137 = vmatpush2.msra.mxu0 0.0
    %138 = vmatprep.subr.mxu0 0.0
    %139 = vmatpush2.msra.mxu0 0.0
    %140 = vmatprep.subr.mxu0 0.0
    %141 = vmatpush2.msra.mxu0 0.0
    %142 = vmatprep.subr.mxu0 0.0
    %143 = vmatpush2.msra.mxu0 0.0
    %144 = vmatprep.subr.mxu0 0.0
    %145 = vmatpush2.msra.mxu0 0.0
    %146 = vmatprep.subr.mxu0 0.0
    %147 = vmatpush2.msra.mxu0 0.0
    %148 = vmatprep.mubr.f32.mxu0 0.0
    %149 = vmatmul.mubr.f32.gmra.mxu0 %v82
    %v150 = vpop.f32.mrf.mxu0
    %v151 = vadd.f32 %v78, %v150
    %v152 = vpop.f32.mrf.mxu0
    %153 = vdwg.mxu0
    %v154 = vxor.u32 %v151, 2147483648
    %v155 = vmul.f32 %v154, 1.442695
    %v156 = vpow.pop %v155
    %v157 = vadd.f32 %v156, 1.0
    %v158 = vrcp.pop %v157
    %v159 = vmul.f32 1.0, %v158
    %v160 = vtanh.pop %v151
    %v161 = vmul.f32 %v159, 0.0
    %163 = vrot.lane.b32.xlu0 %v160, 64
    %v164 = vpop.permute.xlu0 %163
    %v166 = vmul.f32 %v159, %v164
    %168 = vrot.lane.b32.xlu0 %v166, 32
    %v169 = vpop.permute.xlu0 %168
    %v171 = vadd.f32 %v161, %v169
    %v172 = vtanh.pop %v171
    %174 = vrot.lane.b32.xlu0 %v172, 64
    %v175 = vpop.permute.xlu0 %174
    %v177 = vmul.f32 %v159, %v175
    %179 = vrot.lane.b32.xlu0 %v177, 32
    %v180 = vpop.permute.xlu0 %179
    %v182 = vsel %vm63, %v180, 0.0
    %s183 = scalar_lea.vmem [#allocation5], 64
    %v184 = vld [vmem:[%s183] sm:$0xff]
    %v185 = vld [vmem:[%s183 + $0x8] sm:$0xff]
    %v186 = vld [vmem:[%s183 + $0x10] sm:$0xff]
    %v187 = vld [vmem:[%s183 + $0x18] sm:$0xff]
    %v188 = vld [vmem:[%s183 + $0x20] sm:$0xff]
    %v189 = vld [vmem:[%s183 + $0x28] sm:$0xff]
    %v190 = vld [vmem:[%s183 + $0x30] sm:$0xff]
    %v191 = vld [vmem:[%s183 + $0x38] sm:$0xff]
    %s192 = scalar_lea.vmem %s2, 1
    %v193 = vld [vmem:[%s192] sm:$0x1]
    %v195 = vlaneseq
    %v196 = vshrl.u32 %v195, 7
    %v197 = vsub.s32 0, %v196
    %v198 = vrot.slane %v193, %v197
    %v201 = vsel %vm80, %v182, 0
    %203 = vmatprep.subr.mxu0 0.0
    %204 = vmatpush1.msra.mxu0 0.0
    %205 = vmatprep.subr.mxu0 0.0
    %206 = vmatpush1.msra.mxu0 0.0
    %207 = vmatprep.subr.mxu0 0.0
    %208 = vmatpush1.msra.mxu0 0.0
    %209 = vmatprep.subr.mxu0 0.0
    %210 = vmatpush1.msra.mxu0 0.0
    %211 = vmatprep.subr.mxu0 0.0
    %212 = vmatpush1.msra.mxu0 0.0
    %213 = vmatprep.subr.mxu0 0.0
    %214 = vmatpush1.msra.mxu0 0.0
    %215 = vmatprep.subr.mxu0 0.0
    %216 = vmatpush1.msra.mxu0 0.0
    %217 = vmatprep.subr.mxu0 0.0
    %218 = vmatpush1.msra.mxu0 0.0
    %219 = vmatprep.subr.mxu0 0.0
    %220 = vmatpush1.msra.mxu0 %v191
    %221 = vmatprep.subr.mxu0 0.0
    %222 = vmatpush1.msra.mxu0 %v190
    %223 = vmatprep.subr.mxu0 0.0
    %224 = vmatpush1.msra.mxu0 %v189
    %225 = vmatprep.subr.mxu0 0.0
    %226 = vmatpush1.msra.mxu0 %v188
    %227 = vmatprep.subr.mxu0 0.0
    %228 = vmatpush1.msra.mxu0 %v187
    %229 = vmatprep.subr.mxu0 0.0
    %230 = vmatpush1.msra.mxu0 %v186
    %231 = vmatprep.subr.mxu0 0.0
    %232 = vmatpush1.msra.mxu0 %v185
    %233 = vmatprep.subr.mxu0 0.0
    %234 = vmatpush1.msra.mxu0 %v184
    %235 = vmatprep.subr.mxu0 0.0
    %236 = vmatpush2.msra.mxu0 0.0
    %237 = vmatprep.subr.mxu0 0.0
    %238 = vmatpush2.msra.mxu0 0.0
    %239 = vmatprep.subr.mxu0 0.0
    %240 = vmatpush2.msra.mxu0 0.0
    %241 = vmatprep.subr.mxu0 0.0
    %242 = vmatpush2.msra.mxu0 0.0
    %243 = vmatprep.subr.mxu0 0.0
    %244 = vmatpush2.msra.mxu0 0.0
    %245 = vmatprep.subr.mxu0 0.0
    %246 = vmatpush2.msra.mxu0 0.0
    %247 = vmatprep.subr.mxu0 0.0
    %248 = vmatpush2.msra.mxu0 0.0
    %249 = vmatprep.subr.mxu0 0.0
    %250 = vmatpush2.msra.mxu0 0.0
    %251 = vmatprep.subr.mxu0 0.0
    %252 = vmatpush2.msra.mxu0 0.0
    %253 = vmatprep.subr.mxu0 0.0
    %254 = vmatpush2.msra.mxu0 0.0
    %255 = vmatprep.subr.mxu0 0.0
    %256 = vmatpush2.msra.mxu0 0.0
    %257 = vmatprep.subr.mxu0 0.0
    %258 = vmatpush2.msra.mxu0 0.0
    %259 = vmatprep.subr.mxu0 0.0
    %260 = vmatpush2.msra.mxu0 0.0
    %261 = vmatprep.subr.mxu0 0.0
    %262 = vmatpush2.msra.mxu0 0.0
    %263 = vmatprep.subr.mxu0 0.0
    %264 = vmatpush2.msra.mxu0 0.0
    %265 = vmatprep.subr.mxu0 0.0
    %266 = vmatpush2.msra.mxu0 0.0
    %267 = vmatprep.mubr.f32.mxu0 0.0
    %268 = vmatmul.mubr.f32.gmra.mxu0 %v201
    %v269 = vpop.f32.mrf.mxu0
    %v270 = vadd.f32 %v198, %v269
    %v271 = vpop.f32.mrf.mxu0
    %272 = vdwg.mxu0
    %v273 = vxor.u32 %v270, 2147483648
    %v274 = vmul.f32 %v273, 1.442695
    %v275 = vpow.pop %v274
    %v276 = vadd.f32 %v275, 1.0
    %v277 = vrcp.pop %v276
    %v278 = vmul.f32 1.0, %v277
    %v279 = vtanh.pop %v270
    %v280 = vmul.f32 %v278, 0.0
    %282 = vrot.lane.b32.xlu0 %v279, 64
    %v283 = vpop.permute.xlu0 %282
    %v285 = vmul.f32 %v278, %v283
    %287 = vrot.lane.b32.xlu0 %v285, 32
    %v288 = vpop.permute.xlu0 %287
    %v290 = vadd.f32 %v280, %v288
    %v291 = vtanh.pop %v290
    %293 = vrot.lane.b32.xlu0 %v291, 64
    %v294 = vpop.permute.xlu0 %293
    %v296 = vmul.f32 %v278, %v294
    %s297 = scalar_lea.vmem [#allocation2], 8
    %v298 = vld [vmem:[%s297] sm:$0xff]
    %299 = vrot.lane.b32.xlu0 %v177, 64
    %v300 = vpop.permute.xlu0 %299
    %v302 = vsel %vm63, %v298, %v300
    %v304 = vsel %vm80, %v302, 0
    %306 = vmatprep.subr.mxu0 0.0
    %307 = vmatpush1.msra.mxu0 0.0
    %308 = vmatprep.subr.mxu0 0.0
    %309 = vmatpush1.msra.mxu0 0.0
    %310 = vmatprep.subr.mxu0 0.0
    %311 = vmatpush1.msra.mxu0 0.0
    %312 = vmatprep.subr.mxu0 0.0
    %313 = vmatpush1.msra.mxu0 0.0
    %314 = vmatprep.subr.mxu0 0.0
    %315 = vmatpush1.msra.mxu0 0.0
    %316 = vmatprep.subr.mxu0 0.0
    %317 = vmatpush1.msra.mxu0 0.0
    %318 = vmatprep.subr.mxu0 0.0
    %319 = vmatpush1.msra.mxu0 0.0
    %320 = vmatprep.subr.mxu0 0.0
    %321 = vmatpush1.msra.mxu0 0.0
    %322 = vmatprep.subr.mxu0 0.0
    %323 = vmatpush1.msra.mxu0 %v72
    %324 = vmatprep.subr.mxu0 0.0
    %325 = vmatpush1.msra.mxu0 %v71
    %326 = vmatprep.subr.mxu0 0.0
    %327 = vmatpush1.msra.mxu0 %v70
    %328 = vmatprep.subr.mxu0 0.0
    %329 = vmatpush1.msra.mxu0 %v69
    %330 = vmatprep.subr.mxu0 0.0
    %331 = vmatpush1.msra.mxu0 %v68
    %332 = vmatprep.subr.mxu0 0.0
    %333 = vmatpush1.msra.mxu0 %v67
    %334 = vmatprep.subr.mxu0 0.0
    %335 = vmatpush1.msra.mxu0 %v66
    %336 = vmatprep.subr.mxu0 0.0
    %337 = vmatpush1.msra.mxu0 %v65
    %338 = vmatprep.subr.mxu0 0.0
    %339 = vmatpush2.msra.mxu0 0.0
    %340 = vmatprep.subr.mxu0 0.0
    %341 = vmatpush2.msra.mxu0 0.0
    %342 = vmatprep.subr.mxu0 0.0
    %343 = vmatpush2.msra.mxu0 0.0
    %344 = vmatprep.subr.mxu0 0.0
    %345 = vmatpush2.msra.mxu0 0.0
    %346 = vmatprep.subr.mxu0 0.0
    %347 = vmatpush2.msra.mxu0 0.0
    %348 = vmatprep.subr.mxu0 0.0
    %349 = vmatpush2.msra.mxu0 0.0
    %350 = vmatprep.subr.mxu0 0.0
    %351 = vmatpush2.msra.mxu0 0.0
    %352 = vmatprep.subr.mxu0 0.0
    %353 = vmatpush2.msra.mxu0 0.0
    %354 = vmatprep.subr.mxu0 0.0
    %355 = vmatpush2.msra.mxu0 0.0
    %356 = vmatprep.subr.mxu0 0.0
    %357 = vmatpush2.msra.mxu0 0.0
    %358 = vmatprep.subr.mxu0 0.0
    %359 = vmatpush2.msra.mxu0 0.0
    %360 = vmatprep.subr.mxu0 0.0
    %361 = vmatpush2.msra.mxu0 0.0
    %362 = vmatprep.subr.mxu0 0.0
    %363 = vmatpush2.msra.mxu0 0.0
    %364 = vmatprep.subr.mxu0 0.0
    %365 = vmatpush2.msra.mxu0 0.0
    %366 = vmatprep.subr.mxu0 0.0
    %367 = vmatpush2.msra.mxu0 0.0
    %368 = vmatprep.subr.mxu0 0.0
    %369 = vmatpush2.msra.mxu0 0.0
    %370 = vmatprep.mubr.f32.mxu0 0.0
    %371 = vmatmul.mubr.f32.gmra.mxu0 %v304
    %v372 = vpop.f32.mrf.mxu0
    %v373 = vadd.f32 %v78, %v372
    %v374 = vpop.f32.mrf.mxu0
    %375 = vdwg.mxu0
    %v376 = vxor.u32 %v373, 2147483648
    %v377 = vmul.f32 %v376, 1.442695
    %v378 = vpow.pop %v377
    %v379 = vadd.f32 %v378, 1.0
    %v380 = vrcp.pop %v379
    %v381 = vmul.f32 1.0, %v380
    %v382 = vtanh.pop %v373
    %v383 = vmul.f32 %v381, %v171
    %385 = vrot.lane.b32.xlu0 %v382, 64
    %v386 = vpop.permute.xlu0 %385
    %v388 = vmul.f32 %v381, %v386
    %390 = vrot.lane.b32.xlu0 %v388, 32
    %v391 = vpop.permute.xlu0 %390
    %v393 = vadd.f32 %v383, %v391
    %v394 = vtanh.pop %v393
    %396 = vrot.lane.b32.xlu0 %v394, 64
    %v397 = vpop.permute.xlu0 %396
    %v399 = vmul.f32 %v381, %v397
    %401 = vrot.lane.b32.xlu0 %v399, 32
    %v402 = vpop.permute.xlu0 %401
    %405 = vrot.lane.b32.xlu0 %v296, 64
    %v406 = vpop.permute.xlu0 %405
    %v408 = vsel %vm63, %v402, %v406
    %v410 = vsel %vm80, %v408, 0
    %412 = vmatprep.subr.mxu0 0.0
    %413 = vmatpush1.msra.mxu0 0.0
    %414 = vmatprep.subr.mxu0 0.0
    %415 = vmatpush1.msra.mxu0 0.0
    %416 = vmatprep.subr.mxu0 0.0
    %417 = vmatpush1.msra.mxu0 0.0
    %418 = vmatprep.subr.mxu0 0.0
    %419 = vmatpush1.msra.mxu0 0.0
    %420 = vmatprep.subr.mxu0 0.0
    %421 = vmatpush1.msra.mxu0 0.0
    %422 = vmatprep.subr.mxu0 0.0
    %423 = vmatpush1.msra.mxu0 0.0
    %424 = vmatprep.subr.mxu0 0.0
    %425 = vmatpush1.msra.mxu0 0.0
    %426 = vmatprep.subr.mxu0 0.0
    %427 = vmatpush1.msra.mxu0 0.0
    %428 = vmatprep.subr.mxu0 0.0
    %429 = vmatpush1.msra.mxu0 %v191
    %430 = vmatprep.subr.mxu0 0.0
    %431 = vmatpush1.msra.mxu0 %v190
    %432 = vmatprep.subr.mxu0 0.0
    %433 = vmatpush1.msra.mxu0 %v189
    %434 = vmatprep.subr.mxu0 0.0
    %435 = vmatpush1.msra.mxu0 %v188
    %436 = vmatprep.subr.mxu0 0.0
    %437 = vmatpush1.msra.mxu0 %v187
    %438 = vmatprep.subr.mxu0 0.0
    %439 = vmatpush1.msra.mxu0 %v186
    %440 = vmatprep.subr.mxu0 0.0
    %441 = vmatpush1.msra.mxu0 %v185
    %442 = vmatprep.subr.mxu0 0.0
    %443 = vmatpush1.msra.mxu0 %v184
    %444 = vmatprep.subr.mxu0 0.0
    %445 = vmatpush2.msra.mxu0 0.0
    %446 = vmatprep.subr.mxu0 0.0
    %447 = vmatpush2.msra.mxu0 0.0
    %448 = vmatprep.subr.mxu0 0.0
    %449 = vmatpush2.msra.mxu0 0.0
    %450 = vmatprep.subr.mxu0 0.0
    %451 = vmatpush2.msra.mxu0 0.0
    %452 = vmatprep.subr.mxu0 0.0
    %453 = vmatpush2.msra.mxu0 0.0
    %454 = vmatprep.subr.mxu0 0.0
    %455 = vmatpush2.msra.mxu0 0.0
    %456 = vmatprep.subr.mxu0 0.0
    %457 = vmatpush2.msra.mxu0 0.0
    %458 = vmatprep.subr.mxu0 0.0
    %459 = vmatpush2.msra.mxu0 0.0
    %460 = vmatprep.subr.mxu0 0.0
    %461 = vmatpush2.msra.mxu0 0.0
    %462 = vmatprep.subr.mxu0 0.0
    %463 = vmatpush2.msra.mxu0 0.0
    %464 = vmatprep.subr.mxu0 0.0
    %465 = vmatpush2.msra.mxu0 0.0
    %466 = vmatprep.subr.mxu0 0.0
    %467 = vmatpush2.msra.mxu0 0.0
    %468 = vmatprep.subr.mxu0 0.0
    %469 = vmatpush2.msra.mxu0 0.0
    %470 = vmatprep.subr.mxu0 0.0
    %471 = vmatpush2.msra.mxu0 0.0
    %472 = vmatprep.subr.mxu0 0.0
    %473 = vmatpush2.msra.mxu0 0.0
    %474 = vmatprep.subr.mxu0 0.0
    %475 = vmatpush2.msra.mxu0 0.0
    %476 = vmatprep.mubr.f32.mxu0 0.0
    %477 = vmatmul.mubr.f32.gmra.mxu0 %v410
    %v478 = vpop.f32.mrf.mxu0
    %v479 = vadd.f32 %v198, %v478
    %v480 = vpop.f32.mrf.mxu0
    %481 = vdwg.mxu0
    %v482 = vxor.u32 %v479, 2147483648
    %v483 = vmul.f32 %v482, 1.442695
    %v484 = vpow.pop %v483
    %v485 = vadd.f32 %v484, 1.0
    %v486 = vrcp.pop %v485
    %v487 = vmul.f32 1.0, %v486
    %v488 = vtanh.pop %v479
    %v489 = vmul.f32 %v487, %v290
    %491 = vrot.lane.b32.xlu0 %v488, 64
    %v492 = vpop.permute.xlu0 %491
    %v494 = vmul.f32 %v487, %v492
    %496 = vrot.lane.b32.xlu0 %v494, 32
    %v497 = vpop.permute.xlu0 %496
    %v499 = vadd.f32 %v489, %v497
    %v500 = vtanh.pop %v499
    %502 = vrot.lane.b32.xlu0 %v500, 64
    %v503 = vpop.permute.xlu0 %502
    %v505 = vmul.f32 %v487, %v503
    %s506 = scalar_lea.vmem [#allocation2], 16
    %v507 = vld [vmem:[%s506] sm:$0xff]
    %508 = vrot.lane.b32.xlu0 %v399, 64
    %v509 = vpop.permute.xlu0 %508
    %v511 = vsel %vm63, %v507, %v509
    %v513 = vsel %vm80, %v511, 0
    %515 = vmatprep.subr.mxu0 0.0
    %516 = vmatpush1.msra.mxu0 0.0
    %517 = vmatprep.subr.mxu0 0.0
    %518 = vmatpush1.msra.mxu0 0.0
    %519 = vmatprep.subr.mxu0 0.0
    %520 = vmatpush1.msra.mxu0 0.0
    %521 = vmatprep.subr.mxu0 0.0
    %522 = vmatpush1.msra.mxu0 0.0
    %523 = vmatprep.subr.mxu0 0.0
    %524 = vmatpush1.msra.mxu0 0.0
    %525 = vmatprep.subr.mxu0 0.0
    %526 = vmatpush1.msra.mxu0 0.0
    %527 = vmatprep.subr.mxu0 0.0
    %528 = vmatpush1.msra.mxu0 0.0
    %529 = vmatprep.subr.mxu0 0.0
    %530 = vmatpush1.msra.mxu0 0.0
    %531 = vmatprep.subr.mxu0 0.0
    %532 = vmatpush1.msra.mxu0 %v72
    %533 = vmatprep.subr.mxu0 0.0
    %534 = vmatpush1.msra.mxu0 %v71
    %535 = vmatprep.subr.mxu0 0.0
    %536 = vmatpush1.msra.mxu0 %v70
    %537 = vmatprep.subr.mxu0 0.0
    %538 = vmatpush1.msra.mxu0 %v69
    %539 = vmatprep.subr.mxu0 0.0
    %540 = vmatpush1.msra.mxu0 %v68
    %541 = vmatprep.subr.mxu0 0.0
    %542 = vmatpush1.msra.mxu0 %v67
    %543 = vmatprep.subr.mxu0 0.0
    %544 = vmatpush1.msra.mxu0 %v66
    %545 = vmatprep.subr.mxu0 0.0
    %546 = vmatpush1.msra.mxu0 %v65
    %547 = vmatprep.subr.mxu0 0.0
    %548 = vmatpush2.msra.mxu0 0.0
    %549 = vmatprep.subr.mxu0 0.0
    %550 = vmatpush2.msra.mxu0 0.0
    %551 = vmatprep.subr.mxu0 0.0
    %552 = vmatpush2.msra.mxu0 0.0
    %553 = vmatprep.subr.mxu0 0.0
    %554 = vmatpush2.msra.mxu0 0.0
    %555 = vmatprep.subr.mxu0 0.0
    %556 = vmatpush2.msra.mxu0 0.0
    %557 = vmatprep.subr.mxu0 0.0
    %558 = vmatpush2.msra.mxu0 0.0
    %559 = vmatprep.subr.mxu0 0.0
    %560 = vmatpush2.msra.mxu0 0.0
    %561 = vmatprep.subr.mxu0 0.0
    %562 = vmatpush2.msra.mxu0 0.0
    %563 = vmatprep.subr.mxu0 0.0
    %564 = vmatpush2.msra.mxu0 0.0
    %565 = vmatprep.subr.mxu0 0.0
    %566 = vmatpush2.msra.mxu0 0.0
    %567 = vmatprep.subr.mxu0 0.0
    %568 = vmatpush2.msra.mxu0 0.0
    %569 = vmatprep.subr.mxu0 0.0
    %570 = vmatpush2.msra.mxu0 0.0
    %571 = vmatprep.subr.mxu0 0.0
    %572 = vmatpush2.msra.mxu0 0.0
    %573 = vmatprep.subr.mxu0 0.0
    %574 = vmatpush2.msra.mxu0 0.0
    %575 = vmatprep.subr.mxu0 0.0
    %576 = vmatpush2.msra.mxu0 0.0
    %577 = vmatprep.subr.mxu0 0.0
    %578 = vmatpush2.msra.mxu0 0.0
    %579 = vmatprep.mubr.f32.mxu0 0.0
    %580 = vmatmul.mubr.f32.gmra.mxu0 %v513
    %v581 = vpop.f32.mrf.mxu0
    %v582 = vadd.f32 %v78, %v581
    %v583 = vpop.f32.mrf.mxu0
    %584 = vdwg.mxu0
    %v585 = vxor.u32 %v582, 2147483648
    %v586 = vmul.f32 %v585, 1.442695
    %v587 = vpow.pop %v586
    %v588 = vadd.f32 %v587, 1.0
    %v589 = vrcp.pop %v588
    %v590 = vmul.f32 1.0, %v589
    %v591 = vtanh.pop %v582
    %v592 = vmul.f32 %v590, %v393
    %594 = vrot.lane.b32.xlu0 %v591, 64
    %v595 = vpop.permute.xlu0 %594
    %v597 = vmul.f32 %v590, %v595
    %599 = vrot.lane.b32.xlu0 %v597, 32
    %v600 = vpop.permute.xlu0 %599
    %v602 = vadd.f32 %v592, %v600
    %v603 = vtanh.pop %v602
    %605 = vrot.lane.b32.xlu0 %v603, 64
    %v606 = vpop.permute.xlu0 %605
    %v608 = vmul.f32 %v590, %v606
    %610 = vrot.lane.b32.xlu0 %v608, 32
    %v611 = vpop.permute.xlu0 %610
    %614 = vrot.lane.b32.xlu0 %v505, 64
    %v615 = vpop.permute.xlu0 %614
    %v617 = vsel %vm63, %v611, %v615
    %v619 = vsel %vm80, %v617, 0
    %621 = vmatprep.subr.mxu0 0.0
    %622 = vmatpush1.msra.mxu0 0.0
    %623 = vmatprep.subr.mxu0 0.0
    %624 = vmatpush1.msra.mxu0 0.0
    %625 = vmatprep.subr.mxu0 0.0
    %626 = vmatpush1.msra.mxu0 0.0
    %627 = vmatprep.subr.mxu0 0.0
    %628 = vmatpush1.msra.mxu0 0.0
    %629 = vmatprep.subr.mxu0 0.0
    %630 = vmatpush1.msra.mxu0 0.0
    %631 = vmatprep.subr.mxu0 0.0
    %632 = vmatpush1.msra.mxu0 0.0
    %633 = vmatprep.subr.mxu0 0.0
    %634 = vmatpush1.msra.mxu0 0.0
    %635 = vmatprep.subr.mxu0 0.0
    %636 = vmatpush1.msra.mxu0 0.0
    %637 = vmatprep.subr.mxu0 0.0
    %638 = vmatpush1.msra.mxu0 %v191
    %639 = vmatprep.subr.mxu0 0.0
    %640 = vmatpush1.msra.mxu0 %v190
    %641 = vmatprep.subr.mxu0 0.0
    %642 = vmatpush1.msra.mxu0 %v189
    %643 = vmatprep.subr.mxu0 0.0
    %644 = vmatpush1.msra.mxu0 %v188
    %645 = vmatprep.subr.mxu0 0.0
    %646 = vmatpush1.msra.mxu0 %v187
    %647 = vmatprep.subr.mxu0 0.0
    %648 = vmatpush1.msra.mxu0 %v186
    %649 = vmatprep.subr.mxu0 0.0
    %650 = vmatpush1.msra.mxu0 %v185
    %651 = vmatprep.subr.mxu0 0.0
    %652 = vmatpush1.msra.mxu0 %v184
    %653 = vmatprep.subr.mxu0 0.0
    %654 = vmatpush2.msra.mxu0 0.0
    %655 = vmatprep.subr.mxu0 0.0
    %656 = vmatpush2.msra.mxu0 0.0
    %657 = vmatprep.subr.mxu0 0.0
    %658 = vmatpush2.msra.mxu0 0.0
    %659 = vmatprep.subr.mxu0 0.0
    %660 = vmatpush2.msra.mxu0 0.0
    %661 = vmatprep.subr.mxu0 0.0
    %662 = vmatpush2.msra.mxu0 0.0
    %663 = vmatprep.subr.mxu0 0.0
    %664 = vmatpush2.msra.mxu0 0.0
    %665 = vmatprep.subr.mxu0 0.0
    %666 = vmatpush2.msra.mxu0 0.0
    %667 = vmatprep.subr.mxu0 0.0
    %668 = vmatpush2.msra.mxu0 0.0
    %669 = vmatprep.subr.mxu0 0.0
    %670 = vmatpush2.msra.mxu0 0.0
    %671 = vmatprep.subr.mxu0 0.0
    %672 = vmatpush2.msra.mxu0 0.0
    %673 = vmatprep.subr.mxu0 0.0
    %674 = vmatpush2.msra.mxu0 0.0
    %675 = vmatprep.subr.mxu0 0.0
    %676 = vmatpush2.msra.mxu0 0.0
    %677 = vmatprep.subr.mxu0 0.0
    %678 = vmatpush2.msra.mxu0 0.0
    %679 = vmatprep.subr.mxu0 0.0
    %680 = vmatpush2.msra.mxu0 0.0
    %681 = vmatprep.subr.mxu0 0.0
    %682 = vmatpush2.msra.mxu0 0.0
    %683 = vmatprep.subr.mxu0 0.0
    %684 = vmatpush2.msra.mxu0 0.0
    %685 = vmatprep.mubr.f32.mxu0 0.0
    %686 = vmatmul.mubr.f32.gmra.mxu0 %v619
    %v687 = vpop.f32.mrf.mxu0
    %v688 = vadd.f32 %v198, %v687
    %v689 = vpop.f32.mrf.mxu0
    %690 = vdwg.mxu0
    %v691 = vxor.u32 %v688, 2147483648
    %v692 = vmul.f32 %v691, 1.442695
    %v693 = vpow.pop %v692
    %v694 = vadd.f32 %v693, 1.0
    %v695 = vrcp.pop %v694
    %v696 = vmul.f32 1.0, %v695
    %v697 = vtanh.pop %v688
    %v698 = vmul.f32 %v696, %v499
    %700 = vrot.lane.b32.xlu0 %v697, 64
    %v701 = vpop.permute.xlu0 %700
    %v703 = vmul.f32 %v696, %v701
    %705 = vrot.lane.b32.xlu0 %v703, 32
    %v706 = vpop.permute.xlu0 %705
    %v708 = vadd.f32 %v698, %v706
    %v709 = vtanh.pop %v708
    %711 = vrot.lane.b32.xlu0 %v709, 64
    %v712 = vpop.permute.xlu0 %711
    %v714 = vmul.f32 %v696, %v712
    %s715 = scalar_lea.vmem [#allocation2], 24
    %v716 = vld [vmem:[%s715] sm:$0xff]
    %717 = vrot.lane.b32.xlu0 %v608, 64
    %v718 = vpop.permute.xlu0 %717
    %v720 = vsel %vm63, %v716, %v718
    %v722 = vsel %vm80, %v720, 0
    %724 = vmatprep.subr.mxu0 0.0
    %725 = vmatpush1.msra.mxu0 0.0
    %726 = vmatprep.subr.mxu0 0.0
    %727 = vmatpush1.msra.mxu0 0.0
    %728 = vmatprep.subr.mxu0 0.0
    %729 = vmatpush1.msra.mxu0 0.0
    %730 = vmatprep.subr.mxu0 0.0
    %731 = vmatpush1.msra.mxu0 0.0
    %732 = vmatprep.subr.mxu0 0.0
    %733 = vmatpush1.msra.mxu0 0.0
    %734 = vmatprep.subr.mxu0 0.0
    %735 = vmatpush1.msra.mxu0 0.0
    %736 = vmatprep.subr.mxu0 0.0
    %737 = vmatpush1.msra.mxu0 0.0
    %738 = vmatprep.subr.mxu0 0.0
    %739 = vmatpush1.msra.mxu0 0.0
    %740 = vmatprep.subr.mxu0 0.0
    %741 = vmatpush1.msra.mxu0 %v72
    %742 = vmatprep.subr.mxu0 0.0
    %743 = vmatpush1.msra.mxu0 %v71
    %744 = vmatprep.subr.mxu0 0.0
    %745 = vmatpush1.msra.mxu0 %v70
    %746 = vmatprep.subr.mxu0 0.0
    %747 = vmatpush1.msra.mxu0 %v69
    %748 = vmatprep.subr.mxu0 0.0
    %749 = vmatpush1.msra.mxu0 %v68
    %750 = vmatprep.subr.mxu0 0.0
    %751 = vmatpush1.msra.mxu0 %v67
    %752 = vmatprep.subr.mxu0 0.0
    %753 = vmatpush1.msra.mxu0 %v66
    %754 = vmatprep.subr.mxu0 0.0
    %755 = vmatpush1.msra.mxu0 %v65
    %756 = vmatprep.subr.mxu0 0.0
    %757 = vmatpush2.msra.mxu0 0.0
    %758 = vmatprep.subr.mxu0 0.0
    %759 = vmatpush2.msra.mxu0 0.0
    %760 = vmatprep.subr.mxu0 0.0
    %761 = vmatpush2.msra.mxu0 0.0
    %762 = vmatprep.subr.mxu0 0.0
    %763 = vmatpush2.msra.mxu0 0.0
    %764 = vmatprep.subr.mxu0 0.0
    %765 = vmatpush2.msra.mxu0 0.0
    %766 = vmatprep.subr.mxu0 0.0
    %767 = vmatpush2.msra.mxu0 0.0
    %768 = vmatprep.subr.mxu0 0.0
    %769 = vmatpush2.msra.mxu0 0.0
    %770 = vmatprep.subr.mxu0 0.0
    %771 = vmatpush2.msra.mxu0 0.0
    %772 = vmatprep.subr.mxu0 0.0
    %773 = vmatpush2.msra.mxu0 0.0
    %774 = vmatprep.subr.mxu0 0.0
    %775 = vmatpush2.msra.mxu0 0.0
    %776 = vmatprep.subr.mxu0 0.0
    %777 = vmatpush2.msra.mxu0 0.0
    %778 = vmatprep.subr.mxu0 0.0
    %779 = vmatpush2.msra.mxu0 0.0
    %780 = vmatprep.subr.mxu0 0.0
    %781 = vmatpush2.msra.mxu0 0.0
    %782 = vmatprep.subr.mxu0 0.0
    %783 = vmatpush2.msra.mxu0 0.0
    %784 = vmatprep.subr.mxu0 0.0
    %785 = vmatpush2.msra.mxu0 0.0
    %786 = vmatprep.subr.mxu0 0.0
    %787 = vmatpush2.msra.mxu0 0.0
    %788 = vmatprep.mubr.f32.mxu0 0.0
    %789 = vmatmul.mubr.f32.gmra.mxu0 %v722
    %v790 = vpop.f32.mrf.mxu0
    %v791 = vadd.f32 %v78, %v790
    %v792 = vpop.f32.mrf.mxu0
    %793 = vdwg.mxu0
    %v794 = vxor.u32 %v791, 2147483648
    %v795 = vmul.f32 %v794, 1.442695
    %v796 = vpow.pop %v795
    %v797 = vadd.f32 %v796, 1.0
    %v798 = vrcp.pop %v797
    %v799 = vmul.f32 1.0, %v798
    %v800 = vtanh.pop %v791
    %v801 = vmul.f32 %v799, %v602
    %803 = vrot.lane.b32.xlu0 %v800, 64
    %v804 = vpop.permute.xlu0 %803
    %v806 = vmul.f32 %v799, %v804
    %808 = vrot.lane.b32.xlu0 %v806, 32
    %v809 = vpop.permute.xlu0 %808
    %v811 = vadd.f32 %v801, %v809
    %v812 = vtanh.pop %v811
    %814 = vrot.lane.b32.xlu0 %v812, 64
    %v815 = vpop.permute.xlu0 %814
    %v817 = vmul.f32 %v799, %v815
    %819 = vrot.lane.b32.xlu0 %v817, 32
    %v820 = vpop.permute.xlu0 %819
    %823 = vrot.lane.b32.xlu0 %v714, 64
    %v824 = vpop.permute.xlu0 %823
    %v826 = vsel %vm63, %v820, %v824
    %v828 = vsel %vm80, %v826, 0
    %830 = vmatprep.subr.mxu0 0.0
    %831 = vmatpush1.msra.mxu0 0.0
    %832 = vmatprep.subr.mxu0 0.0
    %833 = vmatpush1.msra.mxu0 0.0
    %834 = vmatprep.subr.mxu0 0.0
    %835 = vmatpush1.msra.mxu0 0.0
    %836 = vmatprep.subr.mxu0 0.0
    %837 = vmatpush1.msra.mxu0 0.0
    %838 = vmatprep.subr.mxu0 0.0
    %839 = vmatpush1.msra.mxu0 0.0
    %840 = vmatprep.subr.mxu0 0.0
    %841 = vmatpush1.msra.mxu0 0.0
    %842 = vmatprep.subr.mxu0 0.0
    %843 = vmatpush1.msra.mxu0 0.0
    %844 = vmatprep.subr.mxu0 0.0
    %845 = vmatpush1.msra.mxu0 0.0
    %846 = vmatprep.subr.mxu0 0.0
    %847 = vmatpush1.msra.mxu0 %v191
    %848 = vmatprep.subr.mxu0 0.0
    %849 = vmatpush1.msra.mxu0 %v190
    %850 = vmatprep.subr.mxu0 0.0
    %851 = vmatpush1.msra.mxu0 %v189
    %852 = vmatprep.subr.mxu0 0.0
    %853 = vmatpush1.msra.mxu0 %v188
    %854 = vmatprep.subr.mxu0 0.0
    %855 = vmatpush1.msra.mxu0 %v187
    %856 = vmatprep.subr.mxu0 0.0
    %857 = vmatpush1.msra.mxu0 %v186
    %858 = vmatprep.subr.mxu0 0.0
    %859 = vmatpush1.msra.mxu0 %v185
    %860 = vmatprep.subr.mxu0 0.0
    %861 = vmatpush1.msra.mxu0 %v184
    %862 = vmatprep.subr.mxu0 0.0
    %863 = vmatpush2.msra.mxu0 0.0
    %864 = vmatprep.subr.mxu0 0.0
    %865 = vmatpush2.msra.mxu0 0.0
    %866 = vmatprep.subr.mxu0 0.0
    %867 = vmatpush2.msra.mxu0 0.0
    %868 = vmatprep.subr.mxu0 0.0
    %869 = vmatpush2.msra.mxu0 0.0
    %870 = vmatprep.subr.mxu0 0.0
    %871 = vmatpush2.msra.mxu0 0.0
    %872 = vmatprep.subr.mxu0 0.0
    %873 = vmatpush2.msra.mxu0 0.0
    %874 = vmatprep.subr.mxu0 0.0
    %875 = vmatpush2.msra.mxu0 0.0
    %876 = vmatprep.subr.mxu0 0.0
    %877 = vmatpush2.msra.mxu0 0.0
    %878 = vmatprep.subr.mxu0 0.0
    %879 = vmatpush2.msra.mxu0 0.0
    %880 = vmatprep.subr.mxu0 0.0
    %881 = vmatpush2.msra.mxu0 0.0
    %882 = vmatprep.subr.mxu0 0.0
    %883 = vmatpush2.msra.mxu0 0.0
    %884 = vmatprep.subr.mxu0 0.0
    %885 = vmatpush2.msra.mxu0 0.0
    %886 = vmatprep.subr.mxu0 0.0
    %887 = vmatpush2.msra.mxu0 0.0
    %888 = vmatprep.subr.mxu0 0.0
    %889 = vmatpush2.msra.mxu0 0.0
    %890 = vmatprep.subr.mxu0 0.0
    %891 = vmatpush2.msra.mxu0 0.0
    %892 = vmatprep.subr.mxu0 0.0
    %893 = vmatpush2.msra.mxu0 0.0
    %894 = vmatprep.mubr.f32.mxu0 0.0
    %895 = vmatmul.mubr.f32.gmra.mxu0 %v828
    %v896 = vpop.f32.mrf.mxu0
    %v897 = vadd.f32 %v198, %v896
    %v898 = vpop.f32.mrf.mxu0
    %899 = vdwg.mxu0
    %v900 = vxor.u32 %v897, 2147483648
    %v901 = vmul.f32 %v900, 1.442695
    %v902 = vpow.pop %v901
    %v903 = vadd.f32 %v902, 1.0
    %v904 = vrcp.pop %v903
    %v905 = vmul.f32 1.0, %v904
    %v906 = vtanh.pop %v897
    %v907 = vmul.f32 %v905, %v708
    %909 = vrot.lane.b32.xlu0 %v906, 64
    %v910 = vpop.permute.xlu0 %909
    %v912 = vmul.f32 %v905, %v910
    %914 = vrot.lane.b32.xlu0 %v912, 32
    %v915 = vpop.permute.xlu0 %914
    %v917 = vadd.f32 %v907, %v915
    %v918 = vtanh.pop %v917
    %920 = vrot.lane.b32.xlu0 %v918, 64
    %v921 = vpop.permute.xlu0 %920
    %v923 = vmul.f32 %v905, %v921
    %s924 = scalar_lea.vmem [#allocation2], 32
    %v925 = vld [vmem:[%s924] sm:$0xff]
    %926 = vrot.lane.b32.xlu0 %v817, 64
    %v927 = vpop.permute.xlu0 %926
    %v929 = vsel %vm63, %v925, %v927
    %v931 = vsel %vm80, %v929, 0
    %933 = vmatprep.subr.mxu0 0.0
    %934 = vmatpush1.msra.mxu0 0.0
    %935 = vmatprep.subr.mxu0 0.0
    %936 = vmatpush1.msra.mxu0 0.0
    %937 = vmatprep.subr.mxu0 0.0
    %938 = vmatpush1.msra.mxu0 0.0
    %939 = vmatprep.subr.mxu0 0.0
    %940 = vmatpush1.msra.mxu0 0.0
    %941 = vmatprep.subr.mxu0 0.0
    %942 = vmatpush1.msra.mxu0 0.0
    %943 = vmatprep.subr.mxu0 0.0
    %944 = vmatpush1.msra.mxu0 0.0
    %945 = vmatprep.subr.mxu0 0.0
    %946 = vmatpush1.msra.mxu0 0.0
    %947 = vmatprep.subr.mxu0 0.0
    %948 = vmatpush1.msra.mxu0 0.0
    %949 = vmatprep.subr.mxu0 0.0
    %950 = vmatpush1.msra.mxu0 %v72
    %951 = vmatprep.subr.mxu0 0.0
    %952 = vmatpush1.msra.mxu0 %v71
    %953 = vmatprep.subr.mxu0 0.0
    %954 = vmatpush1.msra.mxu0 %v70
    %955 = vmatprep.subr.mxu0 0.0
    %956 = vmatpush1.msra.mxu0 %v69
    %957 = vmatprep.subr.mxu0 0.0
    %958 = vmatpush1.msra.mxu0 %v68
    %959 = vmatprep.subr.mxu0 0.0
    %960 = vmatpush1.msra.mxu0 %v67
    %961 = vmatprep.subr.mxu0 0.0
    %962 = vmatpush1.msra.mxu0 %v66
    %963 = vmatprep.subr.mxu0 0.0
    %964 = vmatpush1.msra.mxu0 %v65
    %965 = vmatprep.subr.mxu0 0.0
    %966 = vmatpush2.msra.mxu0 0.0
    %967 = vmatprep.subr.mxu0 0.0
    %968 = vmatpush2.msra.mxu0 0.0
    %969 = vmatprep.subr.mxu0 0.0
    %970 = vmatpush2.msra.mxu0 0.0
    %971 = vmatprep.subr.mxu0 0.0
    %972 = vmatpush2.msra.mxu0 0.0
    %973 = vmatprep.subr.mxu0 0.0
    %974 = vmatpush2.msra.mxu0 0.0
    %975 = vmatprep.subr.mxu0 0.0
    %976 = vmatpush2.msra.mxu0 0.0
    %977 = vmatprep.subr.mxu0 0.0
    %978 = vmatpush2.msra.mxu0 0.0
    %979 = vmatprep.subr.mxu0 0.0
    %980 = vmatpush2.msra.mxu0 0.0
    %981 = vmatprep.subr.mxu0 0.0
    %982 = vmatpush2.msra.mxu0 0.0
    %983 = vmatprep.subr.mxu0 0.0
    %984 = vmatpush2.msra.mxu0 0.0
    %985 = vmatprep.subr.mxu0 0.0
    %986 = vmatpush2.msra.mxu0 0.0
    %987 = vmatprep.subr.mxu0 0.0
    %988 = vmatpush2.msra.mxu0 0.0
    %989 = vmatprep.subr.mxu0 0.0
    %990 = vmatpush2.msra.mxu0 0.0
    %991 = vmatprep.subr.mxu0 0.0
    %992 = vmatpush2.msra.mxu0 0.0
    %993 = vmatprep.subr.mxu0 0.0
    %994 = vmatpush2.msra.mxu0 0.0
    %995 = vmatprep.subr.mxu0 0.0
    %996 = vmatpush2.msra.mxu0 0.0
    %997 = vmatprep.mubr.f32.mxu0 0.0
    %998 = vmatmul.mubr.f32.gmra.mxu0 %v931
    %v999 = vpop.f32.mrf.mxu0
    %v1000 = vadd.f32 %v78, %v999
    %v1001 = vpop.f32.mrf.mxu0
    %1002 = vdwg.mxu0
    %v1003 = vxor.u32 %v1000, 2147483648
    %v1004 = vmul.f32 %v1003, 1.442695
    %v1005 = vpow.pop %v1004
    %v1006 = vadd.f32 %v1005, 1.0
    %v1007 = vrcp.pop %v1006
    %v1008 = vmul.f32 1.0, %v1007
    %v1009 = vtanh.pop %v1000
    %v1010 = vmul.f32 %v1008, %v811
    %1012 = vrot.lane.b32.xlu0 %v1009, 64
    %v1013 = vpop.permute.xlu0 %1012
    %v1015 = vmul.f32 %v1008, %v1013
    %1017 = vrot.lane.b32.xlu0 %v1015, 32
    %v1018 = vpop.permute.xlu0 %1017
    %v1020 = vadd.f32 %v1010, %v1018
    %v1021 = vtanh.pop %v1020
    %1023 = vrot.lane.b32.xlu0 %v1021, 64
    %v1024 = vpop.permute.xlu0 %1023
    %v1026 = vmul.f32 %v1008, %v1024
    %1028 = vrot.lane.b32.xlu0 %v1026, 32
    %v1029 = vpop.permute.xlu0 %1028
    %1032 = vrot.lane.b32.xlu0 %v923, 64
    %v1033 = vpop.permute.xlu0 %1032
    %v1035 = vsel %vm63, %v1029, %v1033
    %v1037 = vsel %vm80, %v1035, 0
    %1039 = vmatprep.subr.mxu0 0.0
    %1040 = vmatpush1.msra.mxu0 0.0
    %1041 = vmatprep.subr.mxu0 0.0
    %1042 = vmatpush1.msra.mxu0 0.0
    %1043 = vmatprep.subr.mxu0 0.0
    %1044 = vmatpush1.msra.mxu0 0.0
    %1045 = vmatprep.subr.mxu0 0.0
    %1046 = vmatpush1.msra.mxu0 0.0
    %1047 = vmatprep.subr.mxu0 0.0
    %1048 = vmatpush1.msra.mxu0 0.0
    %1049 = vmatprep.subr.mxu0 0.0
    %1050 = vmatpush1.msra.mxu0 0.0
    %1051 = vmatprep.subr.mxu0 0.0
    %1052 = vmatpush1.msra.mxu0 0.0
    %1053 = vmatprep.subr.mxu0 0.0
    %1054 = vmatpush1.msra.mxu0 0.0
    %1055 = vmatprep.subr.mxu0 0.0
    %1056 = vmatpush1.msra.mxu0 %v191
    %1057 = vmatprep.subr.mxu0 0.0
    %1058 = vmatpush1.msra.mxu0 %v190
    %1059 = vmatprep.subr.mxu0 0.0
    %1060 = vmatpush1.msra.mxu0 %v189
    %1061 = vmatprep.subr.mxu0 0.0
    %1062 = vmatpush1.msra.mxu0 %v188
    %1063 = vmatprep.subr.mxu0 0.0
    %1064 = vmatpush1.msra.mxu0 %v187
    %1065 = vmatprep.subr.mxu0 0.0
    %1066 = vmatpush1.msra.mxu0 %v186
    %1067 = vmatprep.subr.mxu0 0.0
    %1068 = vmatpush1.msra.mxu0 %v185
    %1069 = vmatprep.subr.mxu0 0.0
    %1070 = vmatpush1.msra.mxu0 %v184
    %1071 = vmatprep.subr.mxu0 0.0
    %1072 = vmatpush2.msra.mxu0 0.0
    %1073 = vmatprep.subr.mxu0 0.0
    %1074 = vmatpush2.msra.mxu0 0.0
    %1075 = vmatprep.subr.mxu0 0.0
    %1076 = vmatpush2.msra.mxu0 0.0
    %1077 = vmatprep.subr.mxu0 0.0
    %1078 = vmatpush2.msra.mxu0 0.0
    %1079 = vmatprep.subr.mxu0 0.0
    %1080 = vmatpush2.msra.mxu0 0.0
    %1081 = vmatprep.subr.mxu0 0.0
    %1082 = vmatpush2.msra.mxu0 0.0
    %1083 = vmatprep.subr.mxu0 0.0
    %1084 = vmatpush2.msra.mxu0 0.0
    %1085 = vmatprep.subr.mxu0 0.0
    %1086 = vmatpush2.msra.mxu0 0.0
    %1087 = vmatprep.subr.mxu0 0.0
    %1088 = vmatpush2.msra.mxu0 0.0
    %1089 = vmatprep.subr.mxu0 0.0
    %1090 = vmatpush2.msra.mxu0 0.0
    %1091 = vmatprep.subr.mxu0 0.0
    %1092 = vmatpush2.msra.mxu0 0.0
    %1093 = vmatprep.subr.mxu0 0.0
    %1094 = vmatpush2.msra.mxu0 0.0
    %1095 = vmatprep.subr.mxu0 0.0
    %1096 = vmatpush2.msra.mxu0 0.0
    %1097 = vmatprep.subr.mxu0 0.0
    %1098 = vmatpush2.msra.mxu0 0.0
    %1099 = vmatprep.subr.mxu0 0.0
    %1100 = vmatpush2.msra.mxu0 0.0
    %1101 = vmatprep.subr.mxu0 0.0
    %1102 = vmatpush2.msra.mxu0 0.0
    %1103 = vmatprep.mubr.f32.mxu0 0.0
    %1104 = vmatmul.mubr.f32.gmra.mxu0 %v1037
    %v1105 = vpop.f32.mrf.mxu0
    %v1106 = vadd.f32 %v198, %v1105
    %v1107 = vpop.f32.mrf.mxu0
    %1108 = vdwg.mxu0
    %v1109 = vxor.u32 %v1106, 2147483648
    %v1110 = vmul.f32 %v1109, 1.442695
    %v1111 = vpow.pop %v1110
    %v1112 = vadd.f32 %v1111, 1.0
    %v1113 = vrcp.pop %v1112
    %v1114 = vmul.f32 1.0, %v1113
    %v1115 = vtanh.pop %v1106
    %v1116 = vmul.f32 %v1114, %v917
    %1118 = vrot.lane.b32.xlu0 %v1115, 64
    %v1119 = vpop.permute.xlu0 %1118
    %v1121 = vmul.f32 %v1114, %v1119
    %1123 = vrot.lane.b32.xlu0 %v1121, 32
    %v1124 = vpop.permute.xlu0 %1123
    %v1126 = vadd.f32 %v1116, %v1124
    %v1127 = vtanh.pop %v1126
    %1129 = vrot.lane.b32.xlu0 %v1127, 64
    %v1130 = vpop.permute.xlu0 %1129
    %v1132 = vmul.f32 %v1114, %v1130
    %s1133 = scalar_lea.vmem [#allocation2], 40
    %v1134 = vld [vmem:[%s1133] sm:$0xff]
    %1135 = vrot.lane.b32.xlu0 %v1026, 64
    %v1136 = vpop.permute.xlu0 %1135
    %v1138 = vsel %vm63, %v1134, %v1136
    %v1140 = vsel %vm80, %v1138, 0
    %1142 = vmatprep.subr.mxu0 0.0
    %1143 = vmatpush1.msra.mxu0 0.0
    %1144 = vmatprep.subr.mxu0 0.0
    %1145 = vmatpush1.msra.mxu0 0.0
    %1146 = vmatprep.subr.mxu0 0.0
    %1147 = vmatpush1.msra.mxu0 0.0
    %1148 = vmatprep.subr.mxu0 0.0
    %1149 = vmatpush1.msra.mxu0 0.0
    %1150 = vmatprep.subr.mxu0 0.0
    %1151 = vmatpush1.msra.mxu0 0.0
    %1152 = vmatprep.subr.mxu0 0.0
    %1153 = vmatpush1.msra.mxu0 0.0
    %1154 = vmatprep.subr.mxu0 0.0
    %1155 = vmatpush1.msra.mxu0 0.0
    %1156 = vmatprep.subr.mxu0 0.0
    %1157 = vmatpush1.msra.mxu0 0.0
    %1158 = vmatprep.subr.mxu0 0.0
    %1159 = vmatpush1.msra.mxu0 %v72
    %1160 = vmatprep.subr.mxu0 0.0
    %1161 = vmatpush1.msra.mxu0 %v71
    %1162 = vmatprep.subr.mxu0 0.0
    %1163 = vmatpush1.msra.mxu0 %v70
    %1164 = vmatprep.subr.mxu0 0.0
    %1165 = vmatpush1.msra.mxu0 %v69
    %1166 = vmatprep.subr.mxu0 0.0
    %1167 = vmatpush1.msra.mxu0 %v68
    %1168 = vmatprep.subr.mxu0 0.0
    %1169 = vmatpush1.msra.mxu0 %v67
    %1170 = vmatprep.subr.mxu0 0.0
    %1171 = vmatpush1.msra.mxu0 %v66
    %1172 = vmatprep.subr.mxu0 0.0
    %1173 = vmatpush1.msra.mxu0 %v65
    %1174 = vmatprep.subr.mxu0 0.0
    %1175 = vmatpush2.msra.mxu0 0.0
    %1176 = vmatprep.subr.mxu0 0.0
    %1177 = vmatpush2.msra.mxu0 0.0
    %1178 = vmatprep.subr.mxu0 0.0
    %1179 = vmatpush2.msra.mxu0 0.0
    %1180 = vmatprep.subr.mxu0 0.0
    %1181 = vmatpush2.msra.mxu0 0.0
    %1182 = vmatprep.subr.mxu0 0.0
    %1183 = vmatpush2.msra.mxu0 0.0
    %1184 = vmatprep.subr.mxu0 0.0
    %1185 = vmatpush2.msra.mxu0 0.0
    %1186 = vmatprep.subr.mxu0 0.0
    %1187 = vmatpush2.msra.mxu0 0.0
    %1188 = vmatprep.subr.mxu0 0.0
    %1189 = vmatpush2.msra.mxu0 0.0
    %1190 = vmatprep.subr.mxu0 0.0
    %1191 = vmatpush2.msra.mxu0 0.0
    %1192 = vmatprep.subr.mxu0 0.0
    %1193 = vmatpush2.msra.mxu0 0.0
    %1194 = vmatprep.subr.mxu0 0.0
    %1195 = vmatpush2.msra.mxu0 0.0
    %1196 = vmatprep.subr.mxu0 0.0
    %1197 = vmatpush2.msra.mxu0 0.0
    %1198 = vmatprep.subr.mxu0 0.0
    %1199 = vmatpush2.msra.mxu0 0.0
    %1200 = vmatprep.subr.mxu0 0.0
    %1201 = vmatpush2.msra.mxu0 0.0
    %1202 = vmatprep.subr.mxu0 0.0
    %1203 = vmatpush2.msra.mxu0 0.0
    %1204 = vmatprep.subr.mxu0 0.0
    %1205 = vmatpush2.msra.mxu0 0.0
    %1206 = vmatprep.mubr.f32.mxu0 0.0
    %1207 = vmatmul.mubr.f32.gmra.mxu0 %v1140
    %v1208 = vpop.f32.mrf.mxu0
    %v1209 = vadd.f32 %v78, %v1208
    %v1210 = vpop.f32.mrf.mxu0
    %1211 = vdwg.mxu0
    %v1212 = vxor.u32 %v1209, 2147483648
    %v1213 = vmul.f32 %v1212, 1.442695
    %v1214 = vpow.pop %v1213
    %v1215 = vadd.f32 %v1214, 1.0
    %v1216 = vrcp.pop %v1215
    %v1217 = vmul.f32 1.0, %v1216
    %v1218 = vtanh.pop %v1209
    %v1219 = vmul.f32 %v1217, %v1020
    %1221 = vrot.lane.b32.xlu0 %v1218, 64
    %v1222 = vpop.permute.xlu0 %1221
    %v1224 = vmul.f32 %v1217, %v1222
    %1226 = vrot.lane.b32.xlu0 %v1224, 32
    %v1227 = vpop.permute.xlu0 %1226
    %v1229 = vadd.f32 %v1219, %v1227
    %v1230 = vtanh.pop %v1229
    %1232 = vrot.lane.b32.xlu0 %v1230, 64
    %v1233 = vpop.permute.xlu0 %1232
    %v1235 = vmul.f32 %v1217, %v1233
    %1237 = vrot.lane.b32.xlu0 %v1235, 32
    %v1238 = vpop.permute.xlu0 %1237
    %1241 = vrot.lane.b32.xlu0 %v1132, 64
    %v1242 = vpop.permute.xlu0 %1241
    %v1244 = vsel %vm63, %v1238, %v1242
    %v1246 = vsel %vm80, %v1244, 0
    %1248 = vmatprep.subr.mxu0 0.0
    %1249 = vmatpush1.msra.mxu0 0.0
    %1250 = vmatprep.subr.mxu0 0.0
    %1251 = vmatpush1.msra.mxu0 0.0
    %1252 = vmatprep.subr.mxu0 0.0
    %1253 = vmatpush1.msra.mxu0 0.0
    %1254 = vmatprep.subr.mxu0 0.0
    %1255 = vmatpush1.msra.mxu0 0.0
    %1256 = vmatprep.subr.mxu0 0.0
    %1257 = vmatpush1.msra.mxu0 0.0
    %1258 = vmatprep.subr.mxu0 0.0
    %1259 = vmatpush1.msra.mxu0 0.0
    %1260 = vmatprep.subr.mxu0 0.0
    %1261 = vmatpush1.msra.mxu0 0.0
    %1262 = vmatprep.subr.mxu0 0.0
    %1263 = vmatpush1.msra.mxu0 0.0
    %1264 = vmatprep.subr.mxu0 0.0
    %1265 = vmatpush1.msra.mxu0 %v191
    %1266 = vmatprep.subr.mxu0 0.0
    %1267 = vmatpush1.msra.mxu0 %v190
    %1268 = vmatprep.subr.mxu0 0.0
    %1269 = vmatpush1.msra.mxu0 %v189
    %1270 = vmatprep.subr.mxu0 0.0
    %1271 = vmatpush1.msra.mxu0 %v188
    %1272 = vmatprep.subr.mxu0 0.0
    %1273 = vmatpush1.msra.mxu0 %v187
    %1274 = vmatprep.subr.mxu0 0.0
    %1275 = vmatpush1.msra.mxu0 %v186
    %1276 = vmatprep.subr.mxu0 0.0
    %1277 = vmatpush1.msra.mxu0 %v185
    %1278 = vmatprep.subr.mxu0 0.0
    %1279 = vmatpush1.msra.mxu0 %v184
    %1280 = vmatprep.subr.mxu0 0.0
    %1281 = vmatpush2.msra.mxu0 0.0
    %1282 = vmatprep.subr.mxu0 0.0
    %1283 = vmatpush2.msra.mxu0 0.0
    %1284 = vmatprep.subr.mxu0 0.0
    %1285 = vmatpush2.msra.mxu0 0.0
    %1286 = vmatprep.subr.mxu0 0.0
    %1287 = vmatpush2.msra.mxu0 0.0
    %1288 = vmatprep.subr.mxu0 0.0
    %1289 = vmatpush2.msra.mxu0 0.0
    %1290 = vmatprep.subr.mxu0 0.0
    %1291 = vmatpush2.msra.mxu0 0.0
    %1292 = vmatprep.subr.mxu0 0.0
    %1293 = vmatpush2.msra.mxu0 0.0
    %1294 = vmatprep.subr.mxu0 0.0
    %1295 = vmatpush2.msra.mxu0 0.0
    %1296 = vmatprep.subr.mxu0 0.0
    %1297 = vmatpush2.msra.mxu0 0.0
    %1298 = vmatprep.subr.mxu0 0.0
    %1299 = vmatpush2.msra.mxu0 0.0
    %1300 = vmatprep.subr.mxu0 0.0
    %1301 = vmatpush2.msra.mxu0 0.0
    %1302 = vmatprep.subr.mxu0 0.0
    %1303 = vmatpush2.msra.mxu0 0.0
    %1304 = vmatprep.subr.mxu0 0.0
    %1305 = vmatpush2.msra.mxu0 0.0
    %1306 = vmatprep.subr.mxu0 0.0
    %1307 = vmatpush2.msra.mxu0 0.0
    %1308 = vmatprep.subr.mxu0 0.0
    %1309 = vmatpush2.msra.mxu0 0.0
    %1310 = vmatprep.subr.mxu0 0.0
    %1311 = vmatpush2.msra.mxu0 0.0
    %1312 = vmatprep.mubr.f32.mxu0 0.0
    %1313 = vmatmul.mubr.f32.gmra.mxu0 %v1246
    %v1314 = vpop.f32.mrf.mxu0
    %v1315 = vadd.f32 %v198, %v1314
    %v1316 = vpop.f32.mrf.mxu0
    %1317 = vdwg.mxu0
    %v1318 = vxor.u32 %v1315, 2147483648
    %v1319 = vmul.f32 %v1318, 1.442695
    %v1320 = vpow.pop %v1319
    %v1321 = vadd.f32 %v1320, 1.0
    %v1322 = vrcp.pop %v1321
    %v1323 = vmul.f32 1.0, %v1322
    %v1324 = vtanh.pop %v1315
    %v1325 = vmul.f32 %v1323, %v1126
    %1327 = vrot.lane.b32.xlu0 %v1324, 64
    %v1328 = vpop.permute.xlu0 %1327
    %v1330 = vmul.f32 %v1323, %v1328
    %1332 = vrot.lane.b32.xlu0 %v1330, 32
    %v1333 = vpop.permute.xlu0 %1332
    %v1335 = vadd.f32 %v1325, %v1333
    %v1336 = vtanh.pop %v1335
    %1338 = vrot.lane.b32.xlu0 %v1336, 64
    %v1339 = vpop.permute.xlu0 %1338
    %v1341 = vmul.f32 %v1323, %v1339
    %s1342 = scalar_lea.vmem [#allocation2], 48
    %v1343 = vld [vmem:[%s1342] sm:$0xff]
    %1344 = vrot.lane.b32.xlu0 %v1235, 64
    %v1345 = vpop.permute.xlu0 %1344
    %v1347 = vsel %vm63, %v1343, %v1345
    %v1349 = vsel %vm80, %v1347, 0
    %1351 = vmatprep.subr.mxu0 0.0
    %1352 = vmatpush1.msra.mxu0 0.0
    %1353 = vmatprep.subr.mxu0 0.0
    %1354 = vmatpush1.msra.mxu0 0.0
    %1355 = vmatprep.subr.mxu0 0.0
    %1356 = vmatpush1.msra.mxu0 0.0
    %1357 = vmatprep.subr.mxu0 0.0
    %1358 = vmatpush1.msra.mxu0 0.0
    %1359 = vmatprep.subr.mxu0 0.0
    %1360 = vmatpush1.msra.mxu0 0.0
    %1361 = vmatprep.subr.mxu0 0.0
    %1362 = vmatpush1.msra.mxu0 0.0
    %1363 = vmatprep.subr.mxu0 0.0
    %1364 = vmatpush1.msra.mxu0 0.0
    %1365 = vmatprep.subr.mxu0 0.0
    %1366 = vmatpush1.msra.mxu0 0.0
    %1367 = vmatprep.subr.mxu0 0.0
    %1368 = vmatpush1.msra.mxu0 %v72
    %1369 = vmatprep.subr.mxu0 0.0
    %1370 = vmatpush1.msra.mxu0 %v71
    %1371 = vmatprep.subr.mxu0 0.0
    %1372 = vmatpush1.msra.mxu0 %v70
    %1373 = vmatprep.subr.mxu0 0.0
    %1374 = vmatpush1.msra.mxu0 %v69
    %1375 = vmatprep.subr.mxu0 0.0
    %1376 = vmatpush1.msra.mxu0 %v68
    %1377 = vmatprep.subr.mxu0 0.0
    %1378 = vmatpush1.msra.mxu0 %v67
    %1379 = vmatprep.subr.mxu0 0.0
    %1380 = vmatpush1.msra.mxu0 %v66
    %1381 = vmatprep.subr.mxu0 0.0
    %1382 = vmatpush1.msra.mxu0 %v65
    %1383 = vmatprep.subr.mxu0 0.0
    %1384 = vmatpush2.msra.mxu0 0.0
    %1385 = vmatprep.subr.mxu0 0.0
    %1386 = vmatpush2.msra.mxu0 0.0
    %1387 = vmatprep.subr.mxu0 0.0
    %1388 = vmatpush2.msra.mxu0 0.0
    %1389 = vmatprep.subr.mxu0 0.0
    %1390 = vmatpush2.msra.mxu0 0.0
    %1391 = vmatprep.subr.mxu0 0.0
    %1392 = vmatpush2.msra.mxu0 0.0
    %1393 = vmatprep.subr.mxu0 0.0
    %1394 = vmatpush2.msra.mxu0 0.0
    %1395 = vmatprep.subr.mxu0 0.0
    %1396 = vmatpush2.msra.mxu0 0.0
    %1397 = vmatprep.subr.mxu0 0.0
    %1398 = vmatpush2.msra.mxu0 0.0
    %1399 = vmatprep.subr.mxu0 0.0
    %1400 = vmatpush2.msra.mxu0 0.0
    %1401 = vmatprep.subr.mxu0 0.0
    %1402 = vmatpush2.msra.mxu0 0.0
    %1403 = vmatprep.subr.mxu0 0.0
    %1404 = vmatpush2.msra.mxu0 0.0
    %1405 = vmatprep.subr.mxu0 0.0
    %1406 = vmatpush2.msra.mxu0 0.0
    %1407 = vmatprep.subr.mxu0 0.0
    %1408 = vmatpush2.msra.mxu0 0.0
    %1409 = vmatprep.subr.mxu0 0.0
    %1410 = vmatpush2.msra.mxu0 0.0
    %1411 = vmatprep.subr.mxu0 0.0
    %1412 = vmatpush2.msra.mxu0 0.0
    %1413 = vmatprep.subr.mxu0 0.0
    %1414 = vmatpush2.msra.mxu0 0.0
    %1415 = vmatprep.mubr.f32.mxu0 0.0
    %1416 = vmatmul.mubr.f32.gmra.mxu0 %v1349
    %v1417 = vpop.f32.mrf.mxu0
    %v1418 = vadd.f32 %v78, %v1417
    %v1419 = vpop.f32.mrf.mxu0
    %1420 = vdwg.mxu0
    %v1421 = vxor.u32 %v1418, 2147483648
    %v1422 = vmul.f32 %v1421, 1.442695
    %v1423 = vpow.pop %v1422
    %v1424 = vadd.f32 %v1423, 1.0
    %v1425 = vrcp.pop %v1424
    %v1426 = vmul.f32 1.0, %v1425
    %v1427 = vtanh.pop %v1418
    %v1428 = vmul.f32 %v1426, %v1229
    %1430 = vrot.lane.b32.xlu0 %v1427, 64
    %v1431 = vpop.permute.xlu0 %1430
    %v1433 = vmul.f32 %v1426, %v1431
    %1435 = vrot.lane.b32.xlu0 %v1433, 32
    %v1436 = vpop.permute.xlu0 %1435
    %v1438 = vadd.f32 %v1428, %v1436
    %v1439 = vtanh.pop %v1438
    %1441 = vrot.lane.b32.xlu0 %v1439, 64
    %v1442 = vpop.permute.xlu0 %1441
    %v1444 = vmul.f32 %v1426, %v1442
    %1446 = vrot.lane.b32.xlu0 %v1444, 32
    %v1447 = vpop.permute.xlu0 %1446
    %1450 = vrot.lane.b32.xlu0 %v1341, 64
    %v1451 = vpop.permute.xlu0 %1450
    %v1453 = vsel %vm63, %v1447, %v1451
    %v1455 = vsel %vm80, %v1453, 0
    %1457 = vmatprep.subr.mxu0 0.0
    %1458 = vmatpush1.msra.mxu0 0.0
    %1459 = vmatprep.subr.mxu0 0.0
    %1460 = vmatpush1.msra.mxu0 0.0
    %1461 = vmatprep.subr.mxu0 0.0
    %1462 = vmatpush1.msra.mxu0 0.0
    %1463 = vmatprep.subr.mxu0 0.0
    %1464 = vmatpush1.msra.mxu0 0.0
    %1465 = vmatprep.subr.mxu0 0.0
    %1466 = vmatpush1.msra.mxu0 0.0
    %1467 = vmatprep.subr.mxu0 0.0
    %1468 = vmatpush1.msra.mxu0 0.0
    %1469 = vmatprep.subr.mxu0 0.0
    %1470 = vmatpush1.msra.mxu0 0.0
    %1471 = vmatprep.subr.mxu0 0.0
    %1472 = vmatpush1.msra.mxu0 0.0
    %1473 = vmatprep.subr.mxu0 0.0
    %1474 = vmatpush1.msra.mxu0 %v191
    %1475 = vmatprep.subr.mxu0 0.0
    %1476 = vmatpush1.msra.mxu0 %v190
    %1477 = vmatprep.subr.mxu0 0.0
    %1478 = vmatpush1.msra.mxu0 %v189
    %1479 = vmatprep.subr.mxu0 0.0
    %1480 = vmatpush1.msra.mxu0 %v188
    %1481 = vmatprep.subr.mxu0 0.0
    %1482 = vmatpush1.msra.mxu0 %v187
    %1483 = vmatprep.subr.mxu0 0.0
    %1484 = vmatpush1.msra.mxu0 %v186
    %1485 = vmatprep.subr.mxu0 0.0
    %1486 = vmatpush1.msra.mxu0 %v185
    %1487 = vmatprep.subr.mxu0 0.0
    %1488 = vmatpush1.msra.mxu0 %v184
    %1489 = vmatprep.subr.mxu0 0.0
    %1490 = vmatpush2.msra.mxu0 0.0
    %1491 = vmatprep.subr.mxu0 0.0
    %1492 = vmatpush2.msra.mxu0 0.0
    %1493 = vmatprep.subr.mxu0 0.0
    %1494 = vmatpush2.msra.mxu0 0.0
    %1495 = vmatprep.subr.mxu0 0.0
    %1496 = vmatpush2.msra.mxu0 0.0
    %1497 = vmatprep.subr.mxu0 0.0
    %1498 = vmatpush2.msra.mxu0 0.0
    %1499 = vmatprep.subr.mxu0 0.0
    %1500 = vmatpush2.msra.mxu0 0.0
    %1501 = vmatprep.subr.mxu0 0.0
    %1502 = vmatpush2.msra.mxu0 0.0
    %1503 = vmatprep.subr.mxu0 0.0
    %1504 = vmatpush2.msra.mxu0 0.0
    %1505 = vmatprep.subr.mxu0 0.0
    %1506 = vmatpush2.msra.mxu0 0.0
    %1507 = vmatprep.subr.mxu0 0.0
    %1508 = vmatpush2.msra.mxu0 0.0
    %1509 = vmatprep.subr.mxu0 0.0
    %1510 = vmatpush2.msra.mxu0 0.0
    %1511 = vmatprep.subr.mxu0 0.0
    %1512 = vmatpush2.msra.mxu0 0.0
    %1513 = vmatprep.subr.mxu0 0.0
    %1514 = vmatpush2.msra.mxu0 0.0
    %1515 = vmatprep.subr.mxu0 0.0
    %1516 = vmatpush2.msra.mxu0 0.0
    %1517 = vmatprep.subr.mxu0 0.0
    %1518 = vmatpush2.msra.mxu0 0.0
    %1519 = vmatprep.subr.mxu0 0.0
    %1520 = vmatpush2.msra.mxu0 0.0
    %1521 = vmatprep.mubr.f32.mxu0 0.0
    %1522 = vmatmul.mubr.f32.gmra.mxu0 %v1455
    %v1523 = vpop.f32.mrf.mxu0
    %v1524 = vadd.f32 %v198, %v1523
    %v1525 = vpop.f32.mrf.mxu0
    %1526 = vdwg.mxu0
    %v1527 = vxor.u32 %v1524, 2147483648
    %v1528 = vmul.f32 %v1527, 1.442695
    %v1529 = vpow.pop %v1528
    %v1530 = vadd.f32 %v1529, 1.0
    %v1531 = vrcp.pop %v1530
    %v1532 = vmul.f32 1.0, %v1531
    %v1533 = vtanh.pop %v1524
    %v1534 = vmul.f32 %v1532, %v1335
    %1536 = vrot.lane.b32.xlu0 %v1533, 64
    %v1537 = vpop.permute.xlu0 %1536
    %v1539 = vmul.f32 %v1532, %v1537
    %1541 = vrot.lane.b32.xlu0 %v1539, 32
    %v1542 = vpop.permute.xlu0 %1541
    %v1544 = vadd.f32 %v1534, %v1542
    %v1545 = vtanh.pop %v1544
    %1547 = vrot.lane.b32.xlu0 %v1545, 64
    %v1548 = vpop.permute.xlu0 %1547
    %v1550 = vmul.f32 %v1532, %v1548
    %1552 = vrot.lane.b32.xlu0 %v1550, 96
    %v1553 = vpop.permute.xlu0 %1552
    %1556 = vrot.lane.b32.xlu0 %v1544, 64
    %v1557 = vpop.permute.xlu0 %1556
    %v1559 = vsel %vm63, %v1447, %v1438
    %v1560 = vsel %vm80, %v1559, %v1553
    %vm1561 = vcmask 785408
    %v1562 = vsel %vm1561, %v1560, %v1557
    %v1563 = vld [vmem:[#allocation7] sm:$0xff]
    %v1564 = vld [vmem:[#allocation7 + $0x8] sm:$0xff]
    %v1565 = vld [vmem:[#allocation7 + $0x10] sm:$0xff]
    %v1566 = vld [vmem:[#allocation7 + $0x18] sm:$0xff]
    %v1567 = vld [vmem:[#allocation7 + $0x20] sm:$0xff]
    %v1568 = vld [vmem:[#allocation7 + $0x28] sm:$0xff]
    %v1569 = vld [vmem:[#allocation7 + $0x30] sm:$0xff]
    %v1570 = vld [vmem:[#allocation7 + $0x38] sm:$0xff]
    %v1571 = vld [vmem:[#allocation7 + $0x40] sm:$0xff]
    %v1572 = vld [vmem:[#allocation7 + $0x48] sm:$0xff]
    %v1573 = vld [vmem:[#allocation7 + $0x50] sm:$0xff]
    %v1574 = vld [vmem:[#allocation7 + $0x58] sm:$0xff]
    %v1575 = vld [vmem:[#allocation7 + $0x60] sm:$0xff]
    %v1576 = vld [vmem:[#allocation7 + $0x68] sm:$0xff]
    %v1577 = vld [vmem:[#allocation7 + $0x70] sm:$0xff]
    %v1578 = vld [vmem:[#allocation7 + $0x78] sm:$0xff]
    %v1579 = vld [vmem:[%s4] sm:$0x1]
    %v1581 = vlaneseq
    %v1582 = vshrl.u32 %v1581, 7
    %v1583 = vsub.s32 0, %v1582
    %v1584 = vrot.slane %v1579, %v1583
    %1586 = vmatprep.subr.mxu0 0.0
    %1587 = vmatpush1.msra.mxu0 %v1578
    %1588 = vmatprep.subr.mxu0 0.0
    %1589 = vmatpush1.msra.mxu0 %v1577
    %1590 = vmatprep.subr.mxu0 0.0
    %1591 = vmatpush1.msra.mxu0 %v1576
    %1592 = vmatprep.subr.mxu0 0.0
    %1593 = vmatpush1.msra.mxu0 %v1575
    %1594 = vmatprep.subr.mxu0 0.0
    %1595 = vmatpush1.msra.mxu0 %v1574
    %1596 = vmatprep.subr.mxu0 0.0
    %1597 = vmatpush1.msra.mxu0 %v1573
    %1598 = vmatprep.subr.mxu0 0.0
    %1599 = vmatpush1.msra.mxu0 %v1572
    %1600 = vmatprep.subr.mxu0 0.0
    %1601 = vmatpush1.msra.mxu0 %v1571
    %1602 = vmatprep.subr.mxu0 0.0
    %1603 = vmatpush1.msra.mxu0 %v1570
    %1604 = vmatprep.subr.mxu0 0.0
    %1605 = vmatpush1.msra.mxu0 %v1569
    %1606 = vmatprep.subr.mxu0 0.0
    %1607 = vmatpush1.msra.mxu0 %v1568
    %1608 = vmatprep.subr.mxu0 0.0
    %1609 = vmatpush1.msra.mxu0 %v1567
    %1610 = vmatprep.subr.mxu0 0.0
    %1611 = vmatpush1.msra.mxu0 %v1566
    %1612 = vmatprep.subr.mxu0 0.0
    %1613 = vmatpush1.msra.mxu0 %v1565
    %1614 = vmatprep.subr.mxu0 0.0
    %1615 = vmatpush1.msra.mxu0 %v1564
    %1616 = vmatprep.subr.mxu0 0.0
    %1617 = vmatpush1.msra.mxu0 %v1563
    %1618 = vmatprep.subr.mxu0 0.0
    %1619 = vmatpush2.msra.mxu0 0.0
    %1620 = vmatprep.subr.mxu0 0.0
    %1621 = vmatpush2.msra.mxu0 0.0
    %1622 = vmatprep.subr.mxu0 0.0
    %1623 = vmatpush2.msra.mxu0 0.0
    %1624 = vmatprep.subr.mxu0 0.0
    %1625 = vmatpush2.msra.mxu0 0.0
    %1626 = vmatprep.subr.mxu0 0.0
    %1627 = vmatpush2.msra.mxu0 0.0
    %1628 = vmatprep.subr.mxu0 0.0
    %1629 = vmatpush2.msra.mxu0 0.0
    %1630 = vmatprep.subr.mxu0 0.0
    %1631 = vmatpush2.msra.mxu0 0.0
    %1632 = vmatprep.subr.mxu0 0.0
    %1633 = vmatpush2.msra.mxu0 0.0
    %1634 = vmatprep.subr.mxu0 0.0
    %1635 = vmatpush2.msra.mxu0 0.0
    %1636 = vmatprep.subr.mxu0 0.0
    %1637 = vmatpush2.msra.mxu0 0.0
    %1638 = vmatprep.subr.mxu0 0.0
    %1639 = vmatpush2.msra.mxu0 0.0
    %1640 = vmatprep.subr.mxu0 0.0
    %1641 = vmatpush2.msra.mxu0 0.0
    %1642 = vmatprep.subr.mxu0 0.0
    %1643 = vmatpush2.msra.mxu0 0.0
    %1644 = vmatprep.subr.mxu0 0.0
    %1645 = vmatpush2.msra.mxu0 0.0
    %1646 = vmatprep.subr.mxu0 0.0
    %1647 = vmatpush2.msra.mxu0 0.0
    %1648 = vmatprep.subr.mxu0 0.0
    %1649 = vmatpush2.msra.mxu0 0.0
    %1650 = vmatprep.mubr.f32.mxu0 0.0
    %1651 = vmatmul.mubr.f32.gmra.mxu0 %v1562
    %v1652 = vpop.f32.mrf.mxu0
    %v1653 = vadd.f32 %v1584, %v1652
    %v1654 = vpop.f32.mrf.mxu0
    %1655 = vdwg.mxu0
    %1656 = vst [vmem:[#allocation8] sm:$0xff] %v1653
    // Predicated region
    $region34: #{tpu_custom_call.1} parent=1 // pred_check
      _
    $region35: #{tpu_custom_call.1} parent=1 // pred_check_branch
      %1658 = sbr.rel (0) target = $region37
    $region36: #{tpu_custom_call.1} parent=1 // pred_region
      %s1660 = ssub.s32 128, 128
      %1661 = vsyncadd [#allocation4], %s1660
      %s1663 = sshll.u32 [#allocation8], 4
      %s1664 = int_to_ptr.vmem [resolvable:$true] %s1663
      %1666 = dma.vmem_to_hbm [thread:$0]  %s1664, 128, %s5, [#allocation4]
    $region37: #{tpu_custom_call.1} parent=1 // pred_fallthru
      _
    // Predicated region
    $region38: #{tpu_custom_call.1} parent=1 // pred_check
      _
    $region39: #{tpu_custom_call.1} parent=1 // pred_check_branch
      %1668 = sbr.rel (0) target = $region41
    $region40: #{tpu_custom_call.1} parent=1 // pred_region
      %1669 = dma.done [#allocation4], 128
    $region41: #{tpu_custom_call.1} parent=1 // pred_fallthru
      _
    %1670 = vsyncpa [#allocation3], 1
    %1671 = vsyncpa [#allocation6], 1
    %1672 = vsyncpa [#allocation4], 1

</llo_original>
